<compile_context>
chip_gen: v7x
topology: tpu7x:2x2x1
jax: 0.10.0
libtpu: 0.0.40
codegen_flags: <defaults>
</compile_context>

<pallas_src>
import math
import functools

import jax
import jax.numpy as jnp
from jax import lax
from jax.experimental import pallas as pl
from jax.experimental.pallas import tpu as pltpu

BETA = 1.0
HALF_LOG_2PI = 0.5 * math.log(2.0 * math.pi)


def _vi_kernel(x_ref, eps_ref, w1_ref, b1_ref, wh_ref, bh_ref,
               wd1_ref, bd1_ref, wd2_ref, bd2_ref,
               logits_ref, stats_ref, *, lat, batch, mask_rows):
    f32 = jnp.float32
    bf16 = jnp.bfloat16
    tb = x_ref.shape[0]

    xb = x_ref[...]                      # (TB, D) bf16 (binary -> exact)
    eps = eps_ref[...]                   # (TB, L) f32

    if mask_rows:
        # Last grid step can read past the true batch; zero those rows so the
        # garbage never reaches exp()/the MXU (NaN-checker friendly). The
        # corresponding output rows are OOB and discarded by Pallas anyway.
        row = pl.program_id(0) * tb + lax.broadcasted_iota(jnp.int32, (tb, 1), 0)
        valid = row < batch
        xb = jnp.where(valid, xb, jnp.zeros_like(xb))
        eps = jnp.where(valid, eps, jnp.zeros_like(eps))

    # ---- encoder MLP: h1 = relu(x W1 + b1) ; fused [mu | log_sigma] head ----
    h1 = jnp.maximum(
        jnp.dot(xb, w1_ref[...], preferred_element_type=f32) + b1_ref[...], 0.0)
    head = jnp.dot(h1.astype(bf16), wh_ref[...], preferred_element_type=f32) \
        + bh_ref[...]                    # (TB, 2L)
    mu = head[:, :lat]
    log_sigma = head[:, lat:]
    sigma = jnp.exp(log_sigma)

    # ---- reparameterized sample z ~ qz = Normal(mu, sigma) ----
    z = mu + sigma * eps

    # ---- decoder MLP -> Bernoulli logits ----
    hd = jnp.maximum(
        jnp.dot(z.astype(bf16), wd1_ref[...], preferred_element_type=f32)
        + bd1_ref[...], 0.0)
    logits = jnp.dot(hd.astype(bf16), wd2_ref[...], preferred_element_type=f32) \
        + bd2_ref[...]                   # (TB, D) f32

    # ---- log p(x|z): Bernoulli(logits).log_prob(x) = x*l - softplus(l) ----
    x = xb.astype(f32)
    softplus = jnp.maximum(logits, 0.0) + jnp.log1p(jnp.exp(-jnp.abs(logits)))
    log_px = jnp.sum(x * logits - softplus, axis=1, keepdims=True)        # (TB,1)

    # ---- log p(z): standard Normal ----
    log_pz = jnp.sum(-0.5 * z * z - HALF_LOG_2PI, axis=1, keepdims=True)   # (TB,1)

    # ---- log q(z|x): Normal(mu, sigma); (z - mu)/sigma == eps exactly ----
    log_qz = jnp.sum(-0.5 * eps * eps - log_sigma - HALF_LOG_2PI,
                     axis=1, keepdims=True)                                # (TB,1)

    kl = log_qz - log_pz
    elbo = log_px - kl

    # Diagnostics copy of the decoder logits, bf16 to halve HBM writeback.
    logits_ref[...] = logits.astype(logits_ref.dtype)

    # Single lane-dense (TB, 128) store:
    #   cols [0, L) -> z | L -> log_px | L+1 -> kl | L+2 -> elbo | rest -> 0
    pad = jnp.zeros((tb, 128 - (lat + 3)), f32)
    stats_ref[...] = jnp.concatenate([z, log_px, kl, elbo, pad], axis=1)


def prepare_params(params):
    """One-time (per-model, NOT per-step) weight prep: bf16 MXU operands and
    fused [mu | log_sigma] encoder head.  Biases stay f32."""
    (w1, b1, wmu, bmu, wls, bls, wd1, bd1, wd2, bd2) = params
    bf = jnp.bfloat16
    wh = jnp.concatenate([wmu, wls], axis=1)
    bh = jnp.concatenate([bmu, bls], axis=1)
    return (w1.astype(bf), b1, wh.astype(bf), bh,
            wd1.astype(bf), bd1, wd2.astype(bf), bd2)


def variational_inference(x_nchw, prepared, eps, beta=BETA):
    """Returns (loss, diagnostics, outputs) like the PyTorch module."""
    B = x_nchw.shape[0]
    D = x_nchw.shape[1] * x_nchw.shape[2] * x_nchw.shape[3]

    # x.view(B, -1); binary pixels are exact in bf16, so stream it narrow.
    x = x_nchw.reshape(B, D)
    if x.dtype != jnp.bfloat16:
        x = x.astype(jnp.bfloat16)

    (w1b, b1, whb, bh, wd1b, bd1, wd2b, bd2) = prepared
    H = w1b.shape[1]
    L = wd1b.shape[0]
    assert L + 3 <= 128, "latent dim (+log_px/kl/elbo) must fit one 128-lane slab"

    # Batch tile: large for big batches (amortize per-step overhead), but for
    # small batches capped near B/2 so the parallel grid has >= 2 steps and
    # both v7x TensorCores get work.  Multiples of 16 keep bf16 tiles aligned.
    def _round16(n):
        return ((n + 15) // 16) * 16

    TB = 512
    if B <= TB:
        TB = max(16, _round16((B + 1) // 2))
    grid = (pl.cdiv(B, TB),)
    mask_rows = (B % TB) != 0

    out_shapes = (
        jax.ShapeDtypeStruct((B, D), jnp.bfloat16),    # decoder (Bernoulli) logits
        jax.ShapeDtypeStruct((B, 128), jnp.float32),   # packed z / log_px / kl / elbo
    )
    out_specs = (
        pl.BlockSpec((TB, D), lambda i: (i, 0)),
        pl.BlockSpec((TB, 128), lambda i: (i, 0)),
    )
    in_specs = [
        pl.BlockSpec((TB, D), lambda i: (i, 0)),      # x   bf16 (streamed per tile)
        pl.BlockSpec((TB, L), lambda i: (i, 0)),      # eps f32  (streamed per tile)
        # Weights: constant index_map -> stay resident in VMEM across grid steps.
        # (pipeline_mode=pl.Buffered(1) would pin them single-buffered; only
        #  worth it if H/D grow — footprint is ~1 MiB here.)
        pl.BlockSpec((D, H), lambda i: (0, 0)),       # W1        bf16
        pl.BlockSpec((1, H), lambda i: (0, 0)),       # b1        f32
        pl.BlockSpec((H, 2 * L), lambda i: (0, 0)),   # [Wmu|Wls] bf16
        pl.BlockSpec((1, 2 * L), lambda i: (0, 0)),   # [bmu|bls] f32
        pl.BlockSpec((L, H), lambda i: (0, 0)),       # Wd1       bf16
        pl.BlockSpec((1, H), lambda i: (0, 0)),       # bd1       f32
        pl.BlockSpec((H, D), lambda i: (0, 0)),       # Wd2       bf16
        pl.BlockSpec((1, D), lambda i: (0, 0)),       # bd2       f32
    ]

    logits, stats = pl.pallas_call(
        functools.partial(_vi_kernel, lat=L, batch=B, mask_rows=mask_rows),
        out_shape=out_shapes,
        grid=grid,
        in_specs=in_specs,
        out_specs=out_specs,
        compiler_params=pltpu.CompilerParams(
            dimension_semantics=("parallel",),        # no serial accumulator
            vmem_limit_bytes=32 * 1024 * 1024),
    )(x, eps, w1b, b1, whb, bh, wd1b, bd1, wd2b, bd2)

    z = stats[:, :L]
    log_px = stats[:, L]
    kl = stats[:, L + 1]
    elbo = stats[:, L + 2]
    # Scalar -mean over the true batch stays in the wrapper (keeps the grid
    # axis purely parallel).
    loss = -jnp.mean(log_px - beta * kl)

    diagnostics = {"elbo": elbo, "log_px": log_px, "kl": kl}
    outputs = {"z": z, "px_logits": logits}
    return loss, diagnostics, outputs


def init_params(key, D, H, L):
    """Deterministic PyTorch-nn.Linear-style init (uniform +/- 1/sqrt(fan_in))."""
    ks = jax.random.split(key, 10)

    def lin(kw, kb, fan_in, fan_out):
        bound = 1.0 / math.sqrt(fan_in)
        w = jax.random.uniform(kw, (fan_in, fan_out), jnp.float32, -bound, bound)
        b = jax.random.uniform(kb, (1, fan_out), jnp.float32, -bound, bound)
        return w, b

    w1, b1 = lin(ks[0], ks[1], D, H)
    wmu, bmu = lin(ks[2], ks[3], H, L)
    wls, bls = lin(ks[4], ks[5], H, L)
    wd1, bd1 = lin(ks[6], ks[7], L, H)
    wd2, bd2 = lin(ks[8], ks[9], H, D)
    return (w1, b1, wmu, bmu, wls, bls, wd1, bd1, wd2, bd2)


def reference(x_nchw, params, eps):
    """Pure-JAX reference with the same precision policy (bf16 MXU, f32 math)."""
    B = x_nchw.shape[0]
    x = x_nchw.reshape(B, -1).astype(jnp.float32)
    w1, b1, wmu, bmu, wls, bls, wd1, bd1, wd2, bd2 = params
    bf, f32 = jnp.bfloat16, jnp.float32
    h1 = jnp.maximum(
        jnp.dot(x.astype(bf), w1.astype(bf), preferred_element_type=f32) + b1, 0.0)
    mu = jnp.dot(h1.astype(bf), wmu.astype(bf), preferred_element_type=f32) + bmu
    log_sigma = jnp.dot(h1.astype(bf), wls.astype(bf), preferred_element_type=f32) + bls
    sigma = jnp.exp(log_sigma)
    z = mu + sigma * eps
    hd = jnp.maximum(
        jnp.dot(z.astype(bf), wd1.astype(bf), preferred_element_type=f32) + bd1, 0.0)
    logits = jnp.dot(hd.astype(bf), wd2.astype(bf), preferred_element_type=f32) + bd2
    sp = jnp.maximum(logits, 0.0) + jnp.log1p(jnp.exp(-jnp.abs(logits)))
    log_px = jnp.sum(x * logits - sp, axis=1)
    log_pz = jnp.sum(-0.5 * z * z - HALF_LOG_2PI, axis=1)
    log_qz = jnp.sum(-0.5 * eps * eps - log_sigma - HALF_LOG_2PI, axis=1)
    kl = log_qz - log_pz
    loss = -jnp.mean(log_px - BETA * kl)
    return loss, log_px, kl, z, logits


if __name__ == "__main__":
    B, C, Hs, Ws = 2, 4, 16, 16          # input x: (2, 4, 16, 16) NCHW
    D = C * Hs * Ws                      # 1024 flattened features
    HID, LAT = 128, 16                   # encoder/decoder hidden, latent dims

    key = jax.random.PRNGKey(0)
    k_x, k_eps, k_p = jax.random.split(key, 3)

    # Binarized "image" input (valid Bernoulli support); {0,1} is exact in bf16,
    # so producing bf16 at the source avoids any wrapper-side conversion pass.
    x = (jax.random.uniform(k_x, (B, C, Hs, Ws)) > 0.5).astype(jnp.bfloat16)
    eps = jax.random.normal(k_eps, (B, LAT), jnp.float32)
    params = init_params(k_p, D, HID, LAT)
    prepared = prepare_params(params)     # hoisted, one-time weight prep

    loss, diagnostics, outputs = variational_inference(x, prepared, eps)
    loss = jax.block_until_ready(loss)
    jax.block_until_ready(diagnostics["elbo"])
    jax.block_until_ready(outputs["px_logits"])

    # sanity-check against pure-JAX reference (same bf16-MXU / f32-math policy)
    ref_loss, ref_log_px, ref_kl, ref_z, ref_logits = reference(x, params, eps)
    assert jnp.allclose(loss, ref_loss, rtol=1e-3, atol=1e-3)
    assert jnp.allclose(diagnostics["log_px"], ref_log_px, rtol=1e-3, atol=1e-3)
    assert jnp.allclose(diagnostics["kl"], ref_kl, rtol=1e-3, atol=1e-3)
    assert jnp.allclose(outputs["z"], ref_z, rtol=1e-3, atol=1e-3)
    assert jnp.allclose(diagnostics["elbo"],
                        ref_log_px - ref_kl, rtol=1e-3, atol=1e-3)
    # logits are returned in bf16 (diagnostic copy) -> looser tolerance
    assert jnp.allclose(outputs["px_logits"].astype(jnp.float32), ref_logits,
                        rtol=2e-2, atol=2e-2)

    print("KERNEL_OK")
</pallas_src>

<mosaic_0001>
module attributes {stable_mosaic.version = 11 : i64} {
  func.func @_vi_kernel(%arg0: i32, %arg1: memref<16x1024xbf16, #tpu.memory_space<vmem>>, %arg2: memref<16x16xf32, #tpu.memory_space<vmem>>, %arg3: memref<1024x128xbf16, #tpu.memory_space<vmem>>, %arg4: memref<1x128xf32, #tpu.memory_space<vmem>>, %arg5: memref<128x32xbf16, #tpu.memory_space<vmem>>, %arg6: memref<1x32xf32, #tpu.memory_space<vmem>>, %arg7: memref<16x128xbf16, #tpu.memory_space<vmem>>, %arg8: memref<1x128xf32, #tpu.memory_space<vmem>>, %arg9: memref<128x1024xbf16, #tpu.memory_space<vmem>>, %arg10: memref<1x1024xf32, #tpu.memory_space<vmem>>, %arg11: memref<16x1024xbf16, #tpu.memory_space<vmem>>, %arg12: memref<16x128xf32, #tpu.memory_space<vmem>>) attributes {dimension_semantics = [#tpu.dimension_semantics<parallel>], iteration_bounds = array<i64: 1>, scalar_prefetch = 0 : i64, scratch_operands = 0 : i64, tpu.core_type = #tpu.core_type<tc>, window_params = [{transform_indices = @transform_0, window_bounds = array<i64: 16, 1024>}, {transform_indices = @transform_1, window_bounds = array<i64: 16, 16>}, {pipeline_mode = #tpu.pipeline_mode<synchronous>, transform_indices = @transform_2, window_bounds = array<i64: 1024, 128>}, {pipeline_mode = #tpu.pipeline_mode<synchronous>, transform_indices = @transform_3, window_bounds = array<i64: 1, 128>}, {pipeline_mode = #tpu.pipeline_mode<synchronous>, transform_indices = @transform_4, window_bounds = array<i64: 128, 32>}, {pipeline_mode = #tpu.pipeline_mode<synchronous>, transform_indices = @transform_5, window_bounds = array<i64: 1, 32>}, {pipeline_mode = #tpu.pipeline_mode<synchronous>, transform_indices = @transform_6, window_bounds = array<i64: 16, 128>}, {pipeline_mode = #tpu.pipeline_mode<synchronous>, transform_indices = @transform_7, window_bounds = array<i64: 1, 128>}, {pipeline_mode = #tpu.pipeline_mode<synchronous>, transform_indices = @transform_8, window_bounds = array<i64: 128, 1024>}, {pipeline_mode = #tpu.pipeline_mode<synchronous>, transform_indices = @transform_9, window_bounds = array<i64: 1, 1024>}, {transform_indices = @transform_10, window_bounds = array<i64: 16, 1024>}, {transform_indices = @transform_11, window_bounds = array<i64: 16, 128>}]} {
    %c0 = arith.constant 0 : index
    %c0_0 = arith.constant 0 : index
    %0 = vector.load %arg1[%c0, %c0_0] : memref<16x1024xbf16, #tpu.memory_space<vmem>>, vector<16x1024xbf16>
    %c0_1 = arith.constant 0 : index
    %c0_2 = arith.constant 0 : index
    %1 = vector.load %arg2[%c0_1, %c0_2] : memref<16x16xf32, #tpu.memory_space<vmem>>, vector<16x16xf32>
    %c16_i32 = arith.constant 16 : i32
    %2 = arith.muli %arg0, %c16_i32 : i32
    %3 = tpu.iota {dimensions = array<i32: 0>} : vector<16x1xi32>
    %4 = vector.broadcast %2 : i32 to vector<16x1xi32>
    %5 = arith.addi %4, %3 : vector<16x1xi32>
    %c2_i32 = arith.constant 2 : i32
    %6 = vector.broadcast %c2_i32 : i32 to vector<16x1xi32>
    %7 = arith.cmpi slt, %5, %6 : vector<16x1xi32>
    %cst = arith.constant 0.000000e+00 : bf16
    %8 = vector.broadcast %cst : bf16 to vector<16x1024xbf16>
    %9 = vector.shape_cast %7 : vector<16x1xi1> to vector<16x1xi1>
    %10 = vector.broadcast %9 : vector<16x1xi1> to vector<16x1024xi1>
    %11 = arith.select %10, %0, %8 : vector<16x1024xi1>, vector<16x1024xbf16>
    %cst_3 = arith.constant 0.000000e+00 : f32
    %12 = vector.broadcast %cst_3 : f32 to vector<16x16xf32>
    %13 = vector.shape_cast %7 : vector<16x1xi1> to vector<16x1xi1>
    %14 = vector.broadcast %13 : vector<16x1xi1> to vector<16x16xi1>
    %15 = arith.select %14, %1, %12 : vector<16x16xi1>, vector<16x16xf32>
    %c0_4 = arith.constant 0 : index
    %c0_5 = arith.constant 0 : index
    %16 = vector.load %arg3[%c0_4, %c0_5] : memref<1024x128xbf16, #tpu.memory_space<vmem>>, vector<1024x128xbf16>
    %cst_6 = arith.constant dense<0.000000e+00> : vector<16x128xf32>
    %17 = tpu.matmul %11, %16, %cst_6 {dimension_numbers = #tpu.dot_dimension_numbers<[1], [0], [0], [1], [0, 0, 1, 1], [], []>} : vector<16x1024xbf16>, vector<1024x128xbf16>, vector<16x128xf32> -> vector<16x128xf32>
    %c0_7 = arith.constant 0 : index
    %c0_8 = arith.constant 0 : index
    %18 = vector.load %arg4[%c0_7, %c0_8] : memref<1x128xf32, #tpu.memory_space<vmem>>, vector<1x128xf32>
    %19 = vector.broadcast %18 : vector<1x128xf32> to vector<16x128xf32>
    %20 = arith.addf %17, %19 : vector<16x128xf32>
    %cst_9 = arith.constant 0.000000e+00 : f32
    %21 = vector.broadcast %cst_9 : f32 to vector<16x128xf32>
    %22 = arith.maximumf %20, %21 : vector<16x128xf32>
    %23 = arith.truncf %22 : vector<16x128xf32> to vector<16x128xbf16>
    %c0_10 = arith.constant 0 : index
    %c0_11 = arith.constant 0 : index
    %24 = vector.load %arg5[%c0_10, %c0_11] : memref<128x32xbf16, #tpu.memory_space<vmem>>, vector<128x32xbf16>
    %cst_12 = arith.constant dense<0.000000e+00> : vector<16x32xf32>
    %25 = tpu.matmul %23, %24, %cst_12 {dimension_numbers = #tpu.dot_dimension_numbers<[1], [0], [0], [1], [0, 0, 1, 1], [], []>} : vector<16x128xbf16>, vector<128x32xbf16>, vector<16x32xf32> -> vector<16x32xf32>
    %c0_13 = arith.constant 0 : index
    %c0_14 = arith.constant 0 : index
    %26 = vector.load %arg6[%c0_13, %c0_14] : memref<1x32xf32, #tpu.memory_space<vmem>>, vector<1x32xf32>
    %27 = vector.broadcast %26 : vector<1x32xf32> to vector<16x32xf32>
    %28 = arith.addf %25, %27 : vector<16x32xf32>
    %29 = vector.extract_strided_slice %28 {offsets = [0, 0], sizes = [16, 16], strides = [1, 1]} : vector<16x32xf32> to vector<16x16xf32>
    %30 = vector.extract_strided_slice %28 {offsets = [0, 16], sizes = [16, 16], strides = [1, 1]} : vector<16x32xf32> to vector<16x16xf32>
    %31 = math.exp %30 : vector<16x16xf32>
    %32 = arith.mulf %31, %15 : vector<16x16xf32>
    %33 = arith.addf %29, %32 : vector<16x16xf32>
    %34 = arith.truncf %33 : vector<16x16xf32> to vector<16x16xbf16>
    %c0_15 = arith.constant 0 : index
    %c0_16 = arith.constant 0 : index
    %35 = vector.load %arg7[%c0_15, %c0_16] : memref<16x128xbf16, #tpu.memory_space<vmem>>, vector<16x128xbf16>
    %cst_17 = arith.constant dense<0.000000e+00> : vector<16x128xf32>
    %36 = tpu.matmul %34, %35, %cst_17 {dimension_numbers = #tpu.dot_dimension_numbers<[1], [0], [0], [1], [0, 0, 1, 1], [], []>} : vector<16x16xbf16>, vector<16x128xbf16>, vector<16x128xf32> -> vector<16x128xf32>
    %c0_18 = arith.constant 0 : index
    %c0_19 = arith.constant 0 : index
    %37 = vector.load %arg8[%c0_18, %c0_19] : memref<1x128xf32, #tpu.memory_space<vmem>>, vector<1x128xf32>
    %38 = vector.broadcast %37 : vector<1x128xf32> to vector<16x128xf32>
    %39 = arith.addf %36, %38 : vector<16x128xf32>
    %cst_20 = arith.constant 0.000000e+00 : f32
    %40 = vector.broadcast %cst_20 : f32 to vector<16x128xf32>
    %41 = arith.maximumf %39, %40 : vector<16x128xf32>
    %42 = arith.truncf %41 : vector<16x128xf32> to vector<16x128xbf16>
    %c0_21 = arith.constant 0 : index
    %c0_22 = arith.constant 0 : index
    %43 = vector.load %arg9[%c0_21, %c0_22] : memref<128x1024xbf16, #tpu.memory_space<vmem>>, vector<128x1024xbf16>
    %cst_23 = arith.constant dense<0.000000e+00> : vector<16x1024xf32>
    %44 = tpu.matmul %42, %43, %cst_23 {dimension_numbers = #tpu.dot_dimension_numbers<[1], [0], [0], [1], [0, 0, 1, 1], [], []>} : vector<16x128xbf16>, vector<128x1024xbf16>, vector<16x1024xf32> -> vector<16x1024xf32>
    %c0_24 = arith.constant 0 : index
    %c0_25 = arith.constant 0 : index
    %45 = vector.load %arg10[%c0_24, %c0_25] : memref<1x1024xf32, #tpu.memory_space<vmem>>, vector<1x1024xf32>
    %46 = vector.broadcast %45 : vector<1x1024xf32> to vector<16x1024xf32>
    %47 = arith.addf %44, %46 : vector<16x1024xf32>
    %48 = arith.extf %11 : vector<16x1024xbf16> to vector<16x1024xf32>
    %cst_26 = arith.constant 0.000000e+00 : f32
    %49 = vector.broadcast %cst_26 : f32 to vector<16x1024xf32>
    %50 = arith.maximumf %47, %49 : vector<16x1024xf32>
    %51 = math.absf %47 : vector<16x1024xf32>
    %cst_27 = arith.constant 0.000000e+00 : f32
    %52 = vector.broadcast %cst_27 : f32 to vector<16x1024xf32>
    %53 = arith.subf %52, %51 : vector<16x1024xf32>
    %54 = math.exp %53 : vector<16x1024xf32>
    %55 = math.log1p %54 : vector<16x1024xf32>
    %56 = arith.addf %50, %55 : vector<16x1024xf32>
    %57 = arith.mulf %48, %47 : vector<16x1024xf32>
    %58 = arith.subf %57, %56 : vector<16x1024xf32>
    %cst_28 = arith.constant dense<0.000000e+00> : vector<16xf32>
    %59 = vector.multi_reduction <add>, %58, %cst_28 [1] : vector<16x1024xf32> to vector<16xf32>
    %60 = vector.shape_cast %59 : vector<16xf32> to vector<16x1xf32>
    %cst_29 = arith.constant -5.000000e-01 : f32
    %61 = vector.broadcast %cst_29 : f32 to vector<16x16xf32>
    %62 = arith.mulf %61, %33 : vector<16x16xf32>
    %63 = arith.mulf %62, %33 : vector<16x16xf32>
    %cst_30 = arith.constant 0.918938517 : f32
    %64 = vector.broadcast %cst_30 : f32 to vector<16x16xf32>
    %65 = arith.subf %63, %64 : vector<16x16xf32>
    %cst_31 = arith.constant dense<0.000000e+00> : vector<16xf32>
    %66 = vector.multi_reduction <add>, %65, %cst_31 [1] : vector<16x16xf32> to vector<16xf32>
    %67 = vector.shape_cast %66 : vector<16xf32> to vector<16x1xf32>
    %cst_32 = arith.constant -5.000000e-01 : f32
    %68 = vector.broadcast %cst_32 : f32 to vector<16x16xf32>
    %69 = arith.mulf %68, %15 : vector<16x16xf32>
    %70 = arith.mulf %69, %15 : vector<16x16xf32>
    %71 = arith.subf %70, %30 : vector<16x16xf32>
    %cst_33 = arith.constant 0.918938517 : f32
    %72 = vector.broadcast %cst_33 : f32 to vector<16x16xf32>
    %73 = arith.subf %71, %72 : vector<16x16xf32>
    %cst_34 = arith.constant dense<0.000000e+00> : vector<16xf32>
    %74 = vector.multi_reduction <add>, %73, %cst_34 [1] : vector<16x16xf32> to vector<16xf32>
    %75 = vector.shape_cast %74 : vector<16xf32> to vector<16x1xf32>
    %76 = arith.subf %75, %67 : vector<16x1xf32>
    %77 = arith.subf %60, %76 : vector<16x1xf32>
    %78 = arith.truncf %47 : vector<16x1024xf32> to vector<16x1024xbf16>
    %c0_35 = arith.constant 0 : index
    %c0_36 = arith.constant 0 : index
    %79 = vector.load %arg11[%c0_35, %c0_36] : memref<16x1024xbf16, #tpu.memory_space<vmem>>, vector<16x1024xbf16>
    tpu.vector_store %arg11[%c0_35, %c0_36], %78 {strides = array<i32>} : memref<16x1024xbf16, #tpu.memory_space<vmem>>, vector<16x1024xbf16>,
    %cst_37 = arith.constant 0.000000e+00 : f32
    %80 = vector.broadcast %cst_37 : f32 to vector<16x109xf32>
    %81 = tpu.concatenate %33, %60, %76, %77, %80 in 1 : vector<16x16xf32>, vector<16x1xf32>, vector<16x1xf32>, vector<16x1xf32>, vector<16x109xf32> -> vector<16x128xf32>
    %c0_38 = arith.constant 0 : index
    %c0_39 = arith.constant 0 : index
    %82 = vector.load %arg12[%c0_38, %c0_39] : memref<16x128xf32, #tpu.memory_space<vmem>>, vector<16x128xf32>
    tpu.vector_store %arg12[%c0_38, %c0_39], %81 {strides = array<i32>} : memref<16x128xf32, #tpu.memory_space<vmem>>, vector<16x128xf32>,
    return
  }
  func.func @transform_0(%arg0: i32) -> (i32, i32) {
    %c0_i32 = arith.constant 0 : i32
    %c0_i32_0 = arith.constant 0 : i32
    return %arg0, %c0_i32 : i32, i32
  }
  func.func @transform_1(%arg0: i32) -> (i32, i32) {
    %c0_i32 = arith.constant 0 : i32
    %c0_i32_0 = arith.constant 0 : i32
    return %arg0, %c0_i32 : i32, i32
  }
  func.func @transform_2(%arg0: i32) -> (i32, i32) {
    %c0_i32 = arith.constant 0 : i32
    %c0_i32_0 = arith.constant 0 : i32
    %c0_i32_1 = arith.constant 0 : i32
    return %c0_i32, %c0_i32_0 : i32, i32
  }
  func.func @transform_3(%arg0: i32) -> (i32, i32) {
    %c0_i32 = arith.constant 0 : i32
    %c0_i32_0 = arith.constant 0 : i32
    %c0_i32_1 = arith.constant 0 : i32
    return %c0_i32, %c0_i32_0 : i32, i32
  }
  func.func @transform_4(%arg0: i32) -> (i32, i32) {
    %c0_i32 = arith.constant 0 : i32
    %c0_i32_0 = arith.constant 0 : i32
    %c0_i32_1 = arith.constant 0 : i32
    return %c0_i32, %c0_i32_0 : i32, i32
  }
  func.func @transform_5(%arg0: i32) -> (i32, i32) {
    %c0_i32 = arith.constant 0 : i32
    %c0_i32_0 = arith.constant 0 : i32
    %c0_i32_1 = arith.constant 0 : i32
    return %c0_i32, %c0_i32_0 : i32, i32
  }
  func.func @transform_6(%arg0: i32) -> (i32, i32) {
    %c0_i32 = arith.constant 0 : i32
    %c0_i32_0 = arith.constant 0 : i32
    %c0_i32_1 = arith.constant 0 : i32
    return %c0_i32, %c0_i32_0 : i32, i32
  }
  func.func @transform_7(%arg0: i32) -> (i32, i32) {
    %c0_i32 = arith.constant 0 : i32
    %c0_i32_0 = arith.constant 0 : i32
    %c0_i32_1 = arith.constant 0 : i32
    return %c0_i32, %c0_i32_0 : i32, i32
  }
  func.func @transform_8(%arg0: i32) -> (i32, i32) {
    %c0_i32 = arith.constant 0 : i32
    %c0_i32_0 = arith.constant 0 : i32
    %c0_i32_1 = arith.constant 0 : i32
    return %c0_i32, %c0_i32_0 : i32, i32
  }
  func.func @transform_9(%arg0: i32) -> (i32, i32) {
    %c0_i32 = arith.constant 0 : i32
    %c0_i32_0 = arith.constant 0 : i32
    %c0_i32_1 = arith.constant 0 : i32
    return %c0_i32, %c0_i32_0 : i32, i32
  }
  func.func @transform_10(%arg0: i32) -> (i32, i32) {
    %c0_i32 = arith.constant 0 : i32
    %c0_i32_0 = arith.constant 0 : i32
    return %arg0, %c0_i32 : i32, i32
  }
  func.func @transform_11(%arg0: i32) -> (i32, i32) {
    %c0_i32 = arith.constant 0 : i32
    %c0_i32_0 = arith.constant 0 : i32
    return %arg0, %c0_i32 : i32, i32
  }
}

</mosaic_0001>

<llo_original>
// kernel: tpu_custom_call.1
$region0: #{tpu_custom_call.1}
  #allocation0 [shape = 'u32[]', space=smem, size = 0x4, offset = 0x4, fixed_abs, tag = 'smem constant byte address 0x4 - core index']
  #allocation1 [shape = 'u32[144,128]{1,0:T(1,128)}', space=vmem, size = 0x12000, scoped, tag = 'internal scratch']
  %s0 = inlined_call_operand.vmem [shape: bf16[2,1024], index: 0, kind: input, shape index: {}]
  %s1 = inlined_call_operand.vmem [shape: f32[2,16], index: 1, kind: input, shape index: {}]
  %s2 = inlined_call_operand.hbm [shape: bf16[1024,128], index: 2, kind: input, shape index: {}]
  %s3 = inlined_call_operand.vmem [shape: f32[1,128], index: 3, kind: input, shape index: {}]
  %s4 = inlined_call_operand.vmem [shape: bf16[128,32], index: 4, kind: input, shape index: {}]
  %s5 = inlined_call_operand.vmem [shape: f32[1,32], index: 5, kind: input, shape index: {}]
  %s6 = inlined_call_operand.vmem [shape: bf16[16,128], index: 6, kind: input, shape index: {}]
  %s7 = inlined_call_operand.vmem [shape: f32[1,128], index: 7, kind: input, shape index: {}]
  %s8 = inlined_call_operand.hbm [shape: bf16[128,1024], index: 8, kind: input, shape index: {}]
  %s9 = inlined_call_operand.vmem [shape: f32[1,1024], index: 9, kind: input, shape index: {}]
  %s10 = inlined_call_operand.hbm [shape: bf16[2,1024], index: 10, kind: output, shape index: {0}]
  %s11 = inlined_call_operand.hbm [shape: f32[2,128], index: 11, kind: output, shape index: {1}]
  %12 = xla_tuple %s10, %s11
  %s13 = sld [smem:[#allocation0]]
  $region66: #{tpu_custom_call.1} parent=0
    _
  %s15 = ssub.s32 1, %s13
  %s16 = scalar_select 0, %s15, %s13
  $region1: #{tpu_custom_call.1} parent=0
    #allocation2 [shape = 'u8[262144]{0}', space=vmem, size = 0x40000, scoped, tag = 'input window, operand 2, single buffered']
    #allocation3 [shape = 's32[1]{0}', space=sflag, size = 0x4, scoped, tag = 'scoped memory for tpu_custom_call.1']
    #allocation4 [shape = 's32[1]{0}', space=sflag, size = 0x4, scoped, tag = 'scoped memory for tpu_custom_call.1']
    #allocation5 [shape = 'u8[262144]{0}', space=vmem, size = 0x40000, scoped, tag = 'input window, operand 8, single buffered']
    #allocation6 [shape = 's32[1]{0}', space=sflag, size = 0x4, scoped, tag = 'scoped memory for tpu_custom_call.1']
    #allocation7 [shape = 'u8[32768]{0}', space=vmem, size = 0x8000, scoped, tag = 'output window, operand 0, single buffered']
    #allocation8 [shape = 'u8[8192]{0}', space=vmem, size = 0x2000, scoped, tag = 'output window, operand 1, single buffered']
    #allocation9 [shape = 's32[1]{0}', space=sflag, size = 0x4, scoped, tag = 'scoped memory for tpu_custom_call.1']
    %17 = vsyncpa [#allocation3], 0
    %18 = vsyncpa [#allocation6], 0
    %19 = vsyncpa [#allocation4], 0
    %20 = vsyncpa [#allocation9], 0
    // Predicated region
    $region2: #{tpu_custom_call.1} parent=1 // pred_check
      _
    $region3: #{tpu_custom_call.1} parent=1 // pred_check_branch
      %22 = sbr.rel (0) target = $region5
    $region4: #{tpu_custom_call.1} parent=1 // pred_region
      _
    $region5: #{tpu_custom_call.1} parent=1 // pred_fallthru
      _
    // Predicated region
    $region6: #{tpu_custom_call.1} parent=1 // pred_check
      _
    $region7: #{tpu_custom_call.1} parent=1 // pred_check_branch
      %24 = sbr.rel (0) target = $region9
    $region8: #{tpu_custom_call.1} parent=1 // pred_region
      _
    $region9: #{tpu_custom_call.1} parent=1 // pred_fallthru
      _
    // Predicated region
    $region10: #{tpu_custom_call.1} parent=1 // pred_check
      _
    $region11: #{tpu_custom_call.1} parent=1 // pred_check_branch
      %26 = sbr.rel (0) target = $region13
    $region12: #{tpu_custom_call.1} parent=1 // pred_region
      %s28 = ssub.s32 8192, 8192
      %29 = vsyncadd [#allocation3], %s28
      %s30 = sshll.u32 [#allocation2], 4
      %s31 = int_to_ptr.vmem [resolvable:$true] %s30
      %36 = dma.hbm_to_vmem [thread:$0]  %s2, 8192, %s31, [#allocation3], 64, 64, 4
    $region13: #{tpu_custom_call.1} parent=1 // pred_fallthru
      _
    // Predicated region
    $region14: #{tpu_custom_call.1} parent=1 // pred_check
      _
    $region15: #{tpu_custom_call.1} parent=1 // pred_check_branch
      %38 = sbr.rel (0) target = $region17
    $region16: #{tpu_custom_call.1} parent=1 // pred_region
      _
    $region17: #{tpu_custom_call.1} parent=1 // pred_fallthru
      _
    // Predicated region
    $region18: #{tpu_custom_call.1} parent=1 // pred_check
      _
    $region19: #{tpu_custom_call.1} parent=1 // pred_check_branch
      %40 = sbr.rel (0) target = $region21
    $region20: #{tpu_custom_call.1} parent=1 // pred_region
      _
    $region21: #{tpu_custom_call.1} parent=1 // pred_fallthru
      _
    // Predicated region
    $region22: #{tpu_custom_call.1} parent=1 // pred_check
      _
    $region23: #{tpu_custom_call.1} parent=1 // pred_check_branch
      %42 = sbr.rel (0) target = $region25
    $region24: #{tpu_custom_call.1} parent=1 // pred_region
      _
    $region25: #{tpu_custom_call.1} parent=1 // pred_fallthru
      _
    // Predicated region
    $region26: #{tpu_custom_call.1} parent=1 // pred_check
      _
    $region27: #{tpu_custom_call.1} parent=1 // pred_check_branch
      %44 = sbr.rel (0) target = $region29
    $region28: #{tpu_custom_call.1} parent=1 // pred_region
      _
    $region29: #{tpu_custom_call.1} parent=1 // pred_fallthru
      _
    // Predicated region
    $region30: #{tpu_custom_call.1} parent=1 // pred_check
      _
    $region31: #{tpu_custom_call.1} parent=1 // pred_check_branch
      %46 = sbr.rel (0) target = $region33
    $region32: #{tpu_custom_call.1} parent=1 // pred_region
      _
    $region33: #{tpu_custom_call.1} parent=1 // pred_fallthru
      _
    // Predicated region
    $region34: #{tpu_custom_call.1} parent=1 // pred_check
      _
    $region35: #{tpu_custom_call.1} parent=1 // pred_check_branch
      %48 = sbr.rel (0) target = $region37
    $region36: #{tpu_custom_call.1} parent=1 // pred_region
      %s50 = ssub.s32 8192, 8192
      %51 = vsyncadd [#allocation6], %s50
      %s52 = sshll.u32 [#allocation5], 4
      %s53 = int_to_ptr.vmem [resolvable:$true] %s52
      %58 = dma.hbm_to_vmem [thread:$0]  %s8, 8192, %s53, [#allocation6], 512, 512, 32
    $region37: #{tpu_custom_call.1} parent=1 // pred_fallthru
      _
    // Predicated region
    $region38: #{tpu_custom_call.1} parent=1 // pred_check
      _
    $region39: #{tpu_custom_call.1} parent=1 // pred_check_branch
      %60 = sbr.rel (0) target = $region41
    $region40: #{tpu_custom_call.1} parent=1 // pred_region
      _
    $region41: #{tpu_custom_call.1} parent=1 // pred_fallthru
      _
    // Predicated region
    $region42: #{tpu_custom_call.1} parent=1 // pred_check
      _
    $region43: #{tpu_custom_call.1} parent=1 // pred_check_branch
      %62 = sbr.rel (0) target = $region45
    $region44: #{tpu_custom_call.1} parent=1 // pred_region
      %63 = dma.done [#allocation3], 8192
    $region45: #{tpu_custom_call.1} parent=1 // pred_fallthru
      _
    // Predicated region
    $region46: #{tpu_custom_call.1} parent=1 // pred_check
      _
    $region47: #{tpu_custom_call.1} parent=1 // pred_check_branch
      %65 = sbr.rel (0) target = $region49
    $region48: #{tpu_custom_call.1} parent=1 // pred_region
      %66 = dma.done [#allocation6], 8192
    $region49: #{tpu_custom_call.1} parent=1 // pred_fallthru
      _
    %v69 = vld [vmem:[%s0] sm:$0xff]
    %v70 = vld [vmem:[%s0 + $0x8] sm:$0xff]
    %v71 = vld [vmem:[%s0 + $0x10] sm:$0xff]
    %v72 = vld [vmem:[%s0 + $0x18] sm:$0xff]
    %v73 = vld [vmem:[%s0 + $0x20] sm:$0xff]
    %v74 = vld [vmem:[%s0 + $0x28] sm:$0xff]
    %v75 = vld [vmem:[%s0 + $0x30] sm:$0xff]
    %v76 = vld [vmem:[%s0 + $0x38] sm:$0xff]
    %v77 = vld [vmem:[%s1] sm:$0xff]
    %v78 = vld [vmem:[%s1 + $0x8] sm:$0xff]
    %s79 = smul.u32 0, 16
    %v80 = vlaneseq
    %v81 = vshrl.u32 %v80, 7
    %v82 = vadd.s32 %v81, 8
    %v83 = vstv %s79
    %v84 = vadd.s32 %v83, %v81
    %v85 = vadd.s32 %v83, %v82
    %vm86 = vcmp.lt.s32.totalorder %v84, 2
    %vm87 = vcmp.lt.s32.totalorder %v85, 2
    %v88 = vsel %vm86, 1, 0
    %v89 = vsel %vm87, 1, 0
    %vm90 = vcmp.eq.s32.totalorder %v88, 1
    %vm91 = vcmp.eq.s32.totalorder %v89, 1
    %v92 = vsel %vm90, 1, 0
    %v93 = vsel %vm91, 1, 0
    %v95 = vunpack.c.l.s4 269488144
    %v96 = vunpack.c.0.s8 %v95
    %v97 = vlaneseq
    %v98 = vshrl.u32 %v97, 7
    %v99 = vsub.s32 %v96, %v98
    %v100 = vrot.slane %v92, %v99
    %v102 = vunpack.c.l.s4 842150450
    %v103 = vunpack.c.0.s8 %v102
    %v104 = vlaneseq
    %v105 = vshrl.u32 %v104, 7
    %v106 = vsub.s32 %v103, %v105
    %v107 = vrot.slane %v92, %v106
    %v109 = vunpack.c.l.s4 1414812756
    %v110 = vunpack.c.0.s8 %v109
    %v111 = vlaneseq
    %v112 = vshrl.u32 %v111, 7
    %v113 = vsub.s32 %v110, %v112
    %v114 = vrot.slane %v92, %v113
    %v116 = vunpack.c.l.s4 1987475062
    %v117 = vunpack.c.0.s8 %v116
    %v118 = vlaneseq
    %v119 = vshrl.u32 %v118, 7
    %v120 = vsub.s32 %v117, %v119
    %v121 = vrot.slane %v92, %v120
    %v123 = vunpack.c.l.s4 269488144
    %v124 = vunpack.c.0.s8 %v123
    %v125 = vlaneseq
    %v126 = vshrl.u32 %v125, 7
    %v127 = vsub.s32 %v124, %v126
    %v128 = vrot.slane %v93, %v127
    %v130 = vunpack.c.l.s4 842150450
    %v131 = vunpack.c.0.s8 %v130
    %v132 = vlaneseq
    %v133 = vshrl.u32 %v132, 7
    %v134 = vsub.s32 %v131, %v133
    %v135 = vrot.slane %v93, %v134
    %v137 = vunpack.c.l.s4 1414812756
    %v138 = vunpack.c.0.s8 %v137
    %v139 = vlaneseq
    %v140 = vshrl.u32 %v139, 7
    %v141 = vsub.s32 %v138, %v140
    %v142 = vrot.slane %v93, %v141
    %v144 = vunpack.c.l.s4 1987475062
    %v145 = vunpack.c.0.s8 %v144
    %v146 = vlaneseq
    %v147 = vshrl.u32 %v146, 7
    %v148 = vsub.s32 %v145, %v147
    %v149 = vrot.slane %v93, %v148
    %vm150 = vcmp.ne.s32.totalorder %v100, 0
    %vm151 = vcmp.ne.s32.totalorder %v107, 0
    %vm152 = vcmp.ne.s32.totalorder %v114, 0
    %vm153 = vcmp.ne.s32.totalorder %v121, 0
    %vm154 = vcmp.ne.s32.totalorder %v128, 0
    %vm155 = vcmp.ne.s32.totalorder %v135, 0
    %vm156 = vcmp.ne.s32.totalorder %v142, 0
    %vm157 = vcmp.ne.s32.totalorder %v149, 0
    %v158 = vsel %vm150, 1, 0
    %v159 = vsel %vm151, 1, 0
    %v160 = vsel %vm152, 1, 0
    %v161 = vsel %vm153, 1, 0
    %v162 = vsel %vm154, 1, 0
    %v163 = vsel %vm155, 1, 0
    %v164 = vsel %vm156, 1, 0
    %v165 = vsel %vm157, 1, 0
    %v166 = vpack.c.b16 %v158, %v158
    %v167 = vpack.c.b16 %v159, %v159
    %v168 = vpack.c.b16 %v160, %v160
    %v169 = vpack.c.b16 %v161, %v161
    %v170 = vpack.c.b16 %v162, %v162
    %v171 = vpack.c.b16 %v163, %v163
    %v172 = vpack.c.b16 %v164, %v164
    %v173 = vpack.c.b16 %v165, %v165
    %vm174 = vcmp.ne.s16.totalorder %v166, 0
    %vm175 = vcmp.ne.s16.totalorder %v167, 0
    %vm176 = vcmp.ne.s16.totalorder %v168, 0
    %vm177 = vcmp.ne.s16.totalorder %v169, 0
    %vm178 = vcmp.ne.s16.totalorder %v170, 0
    %vm179 = vcmp.ne.s16.totalorder %v171, 0
    %vm180 = vcmp.ne.s16.totalorder %v172, 0
    %vm181 = vcmp.ne.s16.totalorder %v173, 0
    %v182 = vsel %vm174, %v69, 0
    %v183 = vsel %vm175, %v70, 0
    %v184 = vsel %vm176, %v71, 0
    %v185 = vsel %vm177, %v72, 0
    %v186 = vsel %vm178, %v73, 0
    %v187 = vsel %vm179, %v74, 0
    %v188 = vsel %vm180, %v75, 0
    %v189 = vsel %vm181, %v76, 0
    %v190 = vsel %vm90, %v77, 0.0
    %v191 = vsel %vm91, %v78, 0.0
    %v192 = vld [vmem:[#allocation2] sm:$0xf]
    %v193 = vld [vmem:[#allocation2 + $0x4] sm:$0xf]
    %v194 = vld [vmem:[#allocation2 + $0x8] sm:$0xf]
    %v195 = vld [vmem:[#allocation2 + $0xc] sm:$0xf]
    %v196 = vld [vmem:[#allocation2 + $0x10] sm:$0xf]
    %v197 = vld [vmem:[#allocation2 + $0x14] sm:$0xf]
    %v198 = vld [vmem:[#allocation2 + $0x18] sm:$0xf]
    %v199 = vld [vmem:[#allocation2 + $0x1c] sm:$0xf]
    %v200 = vld [vmem:[#allocation2 + $0x20] sm:$0xf]
    %v201 = vld [vmem:[#allocation2 + $0x24] sm:$0xf]
    %v202 = vld [vmem:[#allocation2 + $0x28] sm:$0xf]
    %v203 = vld [vmem:[#allocation2 + $0x2c] sm:$0xf]
    %v204 = vld [vmem:[#allocation2 + $0x30] sm:$0xf]
    %v205 = vld [vmem:[#allocation2 + $0x34] sm:$0xf]
    %v206 = vld [vmem:[#allocation2 + $0x38] sm:$0xf]
    %v207 = vld [vmem:[#allocation2 + $0x3c] sm:$0xf]
    %v208 = vld [vmem:[#allocation2 + $0x40] sm:$0xf]
    %v209 = vld [vmem:[#allocation2 + $0x44] sm:$0xf]
    %v210 = vld [vmem:[#allocation2 + $0x48] sm:$0xf]
    %v211 = vld [vmem:[#allocation2 + $0x4c] sm:$0xf]
    %v212 = vld [vmem:[#allocation2 + $0x50] sm:$0xf]
    %v213 = vld [vmem:[#allocation2 + $0x54] sm:$0xf]
    %v214 = vld [vmem:[#allocation2 + $0x58] sm:$0xf]
    %v215 = vld [vmem:[#allocation2 + $0x5c] sm:$0xf]
    %v216 = vld [vmem:[#allocation2 + $0x60] sm:$0xf]
    %v217 = vld [vmem:[#allocation2 + $0x64] sm:$0xf]
    %v218 = vld [vmem:[#allocation2 + $0x68] sm:$0xf]
    %v219 = vld [vmem:[#allocation2 + $0x6c] sm:$0xf]
    %v220 = vld [vmem:[#allocation2 + $0x70] sm:$0xf]
    %v221 = vld [vmem:[#allocation2 + $0x74] sm:$0xf]
    %v222 = vld [vmem:[#allocation2 + $0x78] sm:$0xf]
    %v223 = vld [vmem:[#allocation2 + $0x7c] sm:$0xf]
    %v224 = vld [vmem:[#allocation2 + $0x80] sm:$0xf]
    %v225 = vld [vmem:[#allocation2 + $0x84] sm:$0xf]
    %v226 = vld [vmem:[#allocation2 + $0x88] sm:$0xf]
    %v227 = vld [vmem:[#allocation2 + $0x8c] sm:$0xf]
    %v228 = vld [vmem:[#allocation2 + $0x90] sm:$0xf]
    %v229 = vld [vmem:[#allocation2 + $0x94] sm:$0xf]
    %v230 = vld [vmem:[#allocation2 + $0x98] sm:$0xf]
    %v231 = vld [vmem:[#allocation2 + $0x9c] sm:$0xf]
    %v232 = vld [vmem:[#allocation2 + $0xa0] sm:$0xf]
    %v233 = vld [vmem:[#allocation2 + $0xa4] sm:$0xf]
    %v234 = vld [vmem:[#allocation2 + $0xa8] sm:$0xf]
    %v235 = vld [vmem:[#allocation2 + $0xac] sm:$0xf]
    %v236 = vld [vmem:[#allocation2 + $0xb0] sm:$0xf]
    %v237 = vld [vmem:[#allocation2 + $0xb4] sm:$0xf]
    %v238 = vld [vmem:[#allocation2 + $0xb8] sm:$0xf]
    %v239 = vld [vmem:[#allocation2 + $0xbc] sm:$0xf]
    %v240 = vld [vmem:[#allocation2 + $0xc0] sm:$0xf]
    %v241 = vld [vmem:[#allocation2 + $0xc4] sm:$0xf]
    %v242 = vld [vmem:[#allocation2 + $0xc8] sm:$0xf]
    %v243 = vld [vmem:[#allocation2 + $0xcc] sm:$0xf]
    %v244 = vld [vmem:[#allocation2 + $0xd0] sm:$0xf]
    %v245 = vld [vmem:[#allocation2 + $0xd4] sm:$0xf]
    %v246 = vld [vmem:[#allocation2 + $0xd8] sm:$0xf]
    %v247 = vld [vmem:[#allocation2 + $0xdc] sm:$0xf]
    %v248 = vld [vmem:[#allocation2 + $0xe0] sm:$0xf]
    %v249 = vld [vmem:[#allocation2 + $0xe4] sm:$0xf]
    %v250 = vld [vmem:[#allocation2 + $0xe8] sm:$0xf]
    %v251 = vld [vmem:[#allocation2 + $0xec] sm:$0xf]
    %v252 = vld [vmem:[#allocation2 + $0xf0] sm:$0xf]
    %v253 = vld [vmem:[#allocation2 + $0xf4] sm:$0xf]
    %v254 = vld [vmem:[#allocation2 + $0xf8] sm:$0xf]
    %v255 = vld [vmem:[#allocation2 + $0xfc] sm:$0xf]
    %v256 = vld [vmem:[#allocation2 + $0x100] sm:$0xf]
    %v257 = vld [vmem:[#allocation2 + $0x104] sm:$0xf]
    %v258 = vld [vmem:[#allocation2 + $0x108] sm:$0xf]
    %v259 = vld [vmem:[#allocation2 + $0x10c] sm:$0xf]
    %v260 = vld [vmem:[#allocation2 + $0x110] sm:$0xf]
    %v261 = vld [vmem:[#allocation2 + $0x114] sm:$0xf]
    %v262 = vld [vmem:[#allocation2 + $0x118] sm:$0xf]
    %v263 = vld [vmem:[#allocation2 + $0x11c] sm:$0xf]
    %v264 = vld [vmem:[#allocation2 + $0x120] sm:$0xf]
    %v265 = vld [vmem:[#allocation2 + $0x124] sm:$0xf]
    %v266 = vld [vmem:[#allocation2 + $0x128] sm:$0xf]
    %v267 = vld [vmem:[#allocation2 + $0x12c] sm:$0xf]
    %v268 = vld [vmem:[#allocation2 + $0x130] sm:$0xf]
    %v269 = vld [vmem:[#allocation2 + $0x134] sm:$0xf]
    %v270 = vld [vmem:[#allocation2 + $0x138] sm:$0xf]
    %v271 = vld [vmem:[#allocation2 + $0x13c] sm:$0xf]
    %v272 = vld [vmem:[#allocation2 + $0x140] sm:$0xf]
    %v273 = vld [vmem:[#allocation2 + $0x144] sm:$0xf]
    %v274 = vld [vmem:[#allocation2 + $0x148] sm:$0xf]
    %v275 = vld [vmem:[#allocation2 + $0x14c] sm:$0xf]
    %v276 = vld [vmem:[#allocation2 + $0x150] sm:$0xf]
    %v277 = vld [vmem:[#allocation2 + $0x154] sm:$0xf]
    %v278 = vld [vmem:[#allocation2 + $0x158] sm:$0xf]
    %v279 = vld [vmem:[#allocation2 + $0x15c] sm:$0xf]
    %v280 = vld [vmem:[#allocation2 + $0x160] sm:$0xf]
    %v281 = vld [vmem:[#allocation2 + $0x164] sm:$0xf]
    %v282 = vld [vmem:[#allocation2 + $0x168] sm:$0xf]
    %v283 = vld [vmem:[#allocation2 + $0x16c] sm:$0xf]
    %v284 = vld [vmem:[#allocation2 + $0x170] sm:$0xf]
    %v285 = vld [vmem:[#allocation2 + $0x174] sm:$0xf]
    %v286 = vld [vmem:[#allocation2 + $0x178] sm:$0xf]
    %v287 = vld [vmem:[#allocation2 + $0x17c] sm:$0xf]
    %v288 = vld [vmem:[#allocation2 + $0x180] sm:$0xf]
    %v289 = vld [vmem:[#allocation2 + $0x184] sm:$0xf]
    %v290 = vld [vmem:[#allocation2 + $0x188] sm:$0xf]
    %v291 = vld [vmem:[#allocation2 + $0x18c] sm:$0xf]
    %v292 = vld [vmem:[#allocation2 + $0x190] sm:$0xf]
    %v293 = vld [vmem:[#allocation2 + $0x194] sm:$0xf]
    %v294 = vld [vmem:[#allocation2 + $0x198] sm:$0xf]
    %v295 = vld [vmem:[#allocation2 + $0x19c] sm:$0xf]
    %v296 = vld [vmem:[#allocation2 + $0x1a0] sm:$0xf]
    %v297 = vld [vmem:[#allocation2 + $0x1a4] sm:$0xf]
    %v298 = vld [vmem:[#allocation2 + $0x1a8] sm:$0xf]
    %v299 = vld [vmem:[#allocation2 + $0x1ac] sm:$0xf]
    %v300 = vld [vmem:[#allocation2 + $0x1b0] sm:$0xf]
    %v301 = vld [vmem:[#allocation2 + $0x1b4] sm:$0xf]
    %v302 = vld [vmem:[#allocation2 + $0x1b8] sm:$0xf]
    %v303 = vld [vmem:[#allocation2 + $0x1bc] sm:$0xf]
    %v304 = vld [vmem:[#allocation2 + $0x1c0] sm:$0xf]
    %v305 = vld [vmem:[#allocation2 + $0x1c4] sm:$0xf]
    %v306 = vld [vmem:[#allocation2 + $0x1c8] sm:$0xf]
    %v307 = vld [vmem:[#allocation2 + $0x1cc] sm:$0xf]
    %v308 = vld [vmem:[#allocation2 + $0x1d0] sm:$0xf]
    %v309 = vld [vmem:[#allocation2 + $0x1d4] sm:$0xf]
    %v310 = vld [vmem:[#allocation2 + $0x1d8] sm:$0xf]
    %v311 = vld [vmem:[#allocation2 + $0x1dc] sm:$0xf]
    %v312 = vld [vmem:[#allocation2 + $0x1e0] sm:$0xf]
    %v313 = vld [vmem:[#allocation2 + $0x1e4] sm:$0xf]
    %v314 = vld [vmem:[#allocation2 + $0x1e8] sm:$0xf]
    %v315 = vld [vmem:[#allocation2 + $0x1ec] sm:$0xf]
    %v316 = vld [vmem:[#allocation2 + $0x1f0] sm:$0xf]
    %v317 = vld [vmem:[#allocation2 + $0x1f4] sm:$0xf]
    %v318 = vld [vmem:[#allocation2 + $0x1f8] sm:$0xf]
    %v319 = vld [vmem:[#allocation2 + $0x1fc] sm:$0xf]
    %v320 = vld [vmem:[%s3] sm:$0x1]
    %v322 = vlaneseq
    %v323 = vshrl.u32 %v322, 7
    %v324 = vsub.s32 0, %v323
    %v325 = vrot.slane %v320, %v324
    %v335 = vcombine.low %v182, %v183
    %v336 = vcombine.high %v182, %v183
    %v337 = vcombine.low %v184, %v185
    %v338 = vcombine.high %v184, %v185
    %v339 = vcombine.low %v186, %v187
    %v340 = vcombine.high %v186, %v187
    %v341 = vcombine.low %v188, %v189
    %v342 = vcombine.high %v188, %v189
    %v344 = vunpack.c.l.s4 1966171168
    %v345 = vunpack.c.0.s8 %v344
    %v346 = vlaneseq
    %v347 = vshrl.u32 %v346, 7
    %v348 = vsub.s32 %v345, %v347
    %v349 = vrot.slane %v335, %v348
    %v351 = vunpack.c.l.s4 1966171168
    %v352 = vunpack.c.0.s8 %v351
    %v353 = vlaneseq
    %v354 = vshrl.u32 %v353, 7
    %v355 = vsub.s32 %v352, %v354
    %v356 = vrot.slane %v336, %v355
    %v358 = vunpack.c.l.s4 1966171168
    %v359 = vunpack.c.0.s8 %v358
    %v360 = vlaneseq
    %v361 = vshrl.u32 %v360, 7
    %v362 = vsub.s32 %v359, %v361
    %v363 = vrot.slane %v337, %v362
    %v365 = vunpack.c.l.s4 1966171168
    %v366 = vunpack.c.0.s8 %v365
    %v367 = vlaneseq
    %v368 = vshrl.u32 %v367, 7
    %v369 = vsub.s32 %v366, %v368
    %v370 = vrot.slane %v338, %v369
    %v372 = vunpack.c.l.s4 1966171168
    %v373 = vunpack.c.0.s8 %v372
    %v374 = vlaneseq
    %v375 = vshrl.u32 %v374, 7
    %v376 = vsub.s32 %v373, %v375
    %v377 = vrot.slane %v339, %v376
    %v379 = vunpack.c.l.s4 1966171168
    %v380 = vunpack.c.0.s8 %v379
    %v381 = vlaneseq
    %v382 = vshrl.u32 %v381, 7
    %v383 = vsub.s32 %v380, %v382
    %v384 = vrot.slane %v340, %v383
    %v386 = vunpack.c.l.s4 1966171168
    %v387 = vunpack.c.0.s8 %v386
    %v388 = vlaneseq
    %v389 = vshrl.u32 %v388, 7
    %v390 = vsub.s32 %v387, %v389
    %v391 = vrot.slane %v341, %v390
    %v393 = vunpack.c.l.s4 1966171168
    %v394 = vunpack.c.0.s8 %v393
    %v395 = vlaneseq
    %v396 = vshrl.u32 %v395, 7
    %v397 = vsub.s32 %v394, %v396
    %v398 = vrot.slane %v342, %v397
    %v399 = vcombine.low %v349, %v363
    %v400 = vcombine.high %v349, %v363
    %v401 = vcombine.low %v356, %v370
    %v402 = vcombine.high %v356, %v370
    %v403 = vcombine.low %v377, %v391
    %v404 = vcombine.high %v377, %v391
    %v405 = vcombine.low %v384, %v398
    %v406 = vcombine.high %v384, %v398
    %v408 = vunpack.c.l.s4 1966171168
    %v409 = vunpack.c.0.s8 %v408
    %v410 = vlaneseq
    %v411 = vshrl.u32 %v410, 7
    %v412 = vsub.s32 %v409, %v411
    %v413 = vrot.slane %v399, %v412
    %v415 = vunpack.c.l.s4 1966171168
    %v416 = vunpack.c.0.s8 %v415
    %v417 = vlaneseq
    %v418 = vshrl.u32 %v417, 7
    %v419 = vsub.s32 %v416, %v418
    %v420 = vrot.slane %v401, %v419
    %v422 = vunpack.c.l.s4 1966171168
    %v423 = vunpack.c.0.s8 %v422
    %v424 = vlaneseq
    %v425 = vshrl.u32 %v424, 7
    %v426 = vsub.s32 %v423, %v425
    %v427 = vrot.slane %v400, %v426
    %v429 = vunpack.c.l.s4 1966171168
    %v430 = vunpack.c.0.s8 %v429
    %v431 = vlaneseq
    %v432 = vshrl.u32 %v431, 7
    %v433 = vsub.s32 %v430, %v432
    %v434 = vrot.slane %v402, %v433
    %v436 = vunpack.c.l.s4 1966171168
    %v437 = vunpack.c.0.s8 %v436
    %v438 = vlaneseq
    %v439 = vshrl.u32 %v438, 7
    %v440 = vsub.s32 %v437, %v439
    %v441 = vrot.slane %v403, %v440
    %v443 = vunpack.c.l.s4 1966171168
    %v444 = vunpack.c.0.s8 %v443
    %v445 = vlaneseq
    %v446 = vshrl.u32 %v445, 7
    %v447 = vsub.s32 %v444, %v446
    %v448 = vrot.slane %v405, %v447
    %v450 = vunpack.c.l.s4 1966171168
    %v451 = vunpack.c.0.s8 %v450
    %v452 = vlaneseq
    %v453 = vshrl.u32 %v452, 7
    %v454 = vsub.s32 %v451, %v453
    %v455 = vrot.slane %v404, %v454
    %v457 = vunpack.c.l.s4 1966171168
    %v458 = vunpack.c.0.s8 %v457
    %v459 = vlaneseq
    %v460 = vshrl.u32 %v459, 7
    %v461 = vsub.s32 %v458, %v460
    %v462 = vrot.slane %v406, %v461
    %v463 = vcombine.low %v413, %v441
    %v464 = vcombine.high %v413, %v441
    %v465 = vcombine.low %v420, %v448
    %v466 = vcombine.high %v420, %v448
    %v467 = vcombine.low %v427, %v455
    %v468 = vcombine.high %v427, %v455
    %v469 = vcombine.low %v434, %v462
    %v470 = vcombine.high %v434, %v462
    %v607 = vunpack.c.l.b16 %v192
    %v608 = vunpack.c.l.b16 %v193
    %v609 = vunpack.c.l.b16 %v194
    %v610 = vunpack.c.l.b16 %v195
    %v611 = vunpack.c.l.b16 %v196
    %v612 = vunpack.c.l.b16 %v197
    %v613 = vunpack.c.l.b16 %v198
    %v614 = vunpack.c.l.b16 %v199
    %v615 = vunpack.c.l.b16 %v200
    %v616 = vunpack.c.l.b16 %v201
    %v617 = vunpack.c.l.b16 %v202
    %v618 = vunpack.c.l.b16 %v203
    %v619 = vunpack.c.l.b16 %v204
    %v620 = vunpack.c.l.b16 %v205
    %v621 = vunpack.c.l.b16 %v206
    %v622 = vunpack.c.l.b16 %v207
    %v623 = vunpack.c.l.b16 %v208
    %v624 = vunpack.c.l.b16 %v209
    %v625 = vunpack.c.l.b16 %v210
    %v626 = vunpack.c.l.b16 %v211
    %v627 = vunpack.c.l.b16 %v212
    %v628 = vunpack.c.l.b16 %v213
    %v629 = vunpack.c.l.b16 %v214
    %v630 = vunpack.c.l.b16 %v215
    %v631 = vunpack.c.l.b16 %v216
    %v632 = vunpack.c.l.b16 %v217
    %v633 = vunpack.c.l.b16 %v218
    %v634 = vunpack.c.l.b16 %v219
    %v635 = vunpack.c.l.b16 %v220
    %v636 = vunpack.c.l.b16 %v221
    %v637 = vunpack.c.l.b16 %v222
    %v638 = vunpack.c.l.b16 %v223
    %v639 = vunpack.c.l.b16 %v224
    %v640 = vunpack.c.l.b16 %v225
    %v641 = vunpack.c.l.b16 %v226
    %v642 = vunpack.c.l.b16 %v227
    %v643 = vunpack.c.l.b16 %v228
    %v644 = vunpack.c.l.b16 %v229
    %v645 = vunpack.c.l.b16 %v230
    %v646 = vunpack.c.l.b16 %v231
    %v647 = vunpack.c.l.b16 %v232
    %v648 = vunpack.c.l.b16 %v233
    %v649 = vunpack.c.l.b16 %v234
    %v650 = vunpack.c.l.b16 %v235
    %v651 = vunpack.c.l.b16 %v236
    %v652 = vunpack.c.l.b16 %v237
    %v653 = vunpack.c.l.b16 %v238
    %v654 = vunpack.c.l.b16 %v239
    %v655 = vunpack.c.l.b16 %v240
    %v656 = vunpack.c.l.b16 %v241
    %v657 = vunpack.c.l.b16 %v242
    %v658 = vunpack.c.l.b16 %v243
    %v659 = vunpack.c.l.b16 %v244
    %v660 = vunpack.c.l.b16 %v245
    %v661 = vunpack.c.l.b16 %v246
    %v662 = vunpack.c.l.b16 %v247
    %v663 = vunpack.c.l.b16 %v248
    %v664 = vunpack.c.l.b16 %v249
    %v665 = vunpack.c.l.b16 %v250
    %v666 = vunpack.c.l.b16 %v251
    %v667 = vunpack.c.l.b16 %v252
    %v668 = vunpack.c.l.b16 %v253
    %v669 = vunpack.c.l.b16 %v254
    %v670 = vunpack.c.l.b16 %v255
    %v671 = vunpack.c.l.b16 %v256
    %v672 = vunpack.c.l.b16 %v257
    %v673 = vunpack.c.l.b16 %v258
    %v674 = vunpack.c.l.b16 %v259
    %v675 = vunpack.c.l.b16 %v260
    %v676 = vunpack.c.l.b16 %v261
    %v677 = vunpack.c.l.b16 %v262
    %v678 = vunpack.c.l.b16 %v263
    %v679 = vunpack.c.l.b16 %v264
    %v680 = vunpack.c.l.b16 %v265
    %v681 = vunpack.c.l.b16 %v266
    %v682 = vunpack.c.l.b16 %v267
    %v683 = vunpack.c.l.b16 %v268
    %v684 = vunpack.c.l.b16 %v269
    %v685 = vunpack.c.l.b16 %v270
    %v686 = vunpack.c.l.b16 %v271
    %v687 = vunpack.c.l.b16 %v272
    %v688 = vunpack.c.l.b16 %v273
    %v689 = vunpack.c.l.b16 %v274
    %v690 = vunpack.c.l.b16 %v275
    %v691 = vunpack.c.l.b16 %v276
    %v692 = vunpack.c.l.b16 %v277
    %v693 = vunpack.c.l.b16 %v278
    %v694 = vunpack.c.l.b16 %v279
    %v695 = vunpack.c.l.b16 %v280
    %v696 = vunpack.c.l.b16 %v281
    %v697 = vunpack.c.l.b16 %v282
    %v698 = vunpack.c.l.b16 %v283
    %v699 = vunpack.c.l.b16 %v284
    %v700 = vunpack.c.l.b16 %v285
    %v701 = vunpack.c.l.b16 %v286
    %v702 = vunpack.c.l.b16 %v287
    %v703 = vunpack.c.l.b16 %v288
    %v704 = vunpack.c.l.b16 %v289
    %v705 = vunpack.c.l.b16 %v290
    %v706 = vunpack.c.l.b16 %v291
    %v707 = vunpack.c.l.b16 %v292
    %v708 = vunpack.c.l.b16 %v293
    %v709 = vunpack.c.l.b16 %v294
    %v710 = vunpack.c.l.b16 %v295
    %v711 = vunpack.c.l.b16 %v296
    %v712 = vunpack.c.l.b16 %v297
    %v713 = vunpack.c.l.b16 %v298
    %v714 = vunpack.c.l.b16 %v299
    %v715 = vunpack.c.l.b16 %v300
    %v716 = vunpack.c.l.b16 %v301
    %v717 = vunpack.c.l.b16 %v302
    %v718 = vunpack.c.l.b16 %v303
    %v719 = vunpack.c.l.b16 %v304
    %v720 = vunpack.c.l.b16 %v305
    %v721 = vunpack.c.l.b16 %v306
    %v722 = vunpack.c.l.b16 %v307
    %v723 = vunpack.c.l.b16 %v308
    %v724 = vunpack.c.l.b16 %v309
    %v725 = vunpack.c.l.b16 %v310
    %v726 = vunpack.c.l.b16 %v311
    %v727 = vunpack.c.l.b16 %v312
    %v728 = vunpack.c.l.b16 %v313
    %v729 = vunpack.c.l.b16 %v314
    %v730 = vunpack.c.l.b16 %v315
    %v731 = vunpack.c.l.b16 %v316
    %v732 = vunpack.c.l.b16 %v317
    %v733 = vunpack.c.l.b16 %v318
    %v734 = vunpack.c.l.b16 %v319
    %v735 = vpack.c.b16 %v608, %v607
    %v736 = vpack.c.b16 %v610, %v609
    %v737 = vpack.c.b16 %v612, %v611
    %v738 = vpack.c.b16 %v614, %v613
    %v739 = vpack.c.b16 %v616, %v615
    %v740 = vpack.c.b16 %v618, %v617
    %v741 = vpack.c.b16 %v620, %v619
    %v742 = vpack.c.b16 %v622, %v621
    %v743 = vpack.c.b16 %v624, %v623
    %v744 = vpack.c.b16 %v626, %v625
    %v745 = vpack.c.b16 %v628, %v627
    %v746 = vpack.c.b16 %v630, %v629
    %v747 = vpack.c.b16 %v632, %v631
    %v748 = vpack.c.b16 %v634, %v633
    %v749 = vpack.c.b16 %v636, %v635
    %v750 = vpack.c.b16 %v638, %v637
    %v751 = vpack.c.b16 %v640, %v639
    %v752 = vpack.c.b16 %v642, %v641
    %v753 = vpack.c.b16 %v644, %v643
    %v754 = vpack.c.b16 %v646, %v645
    %v755 = vpack.c.b16 %v648, %v647
    %v756 = vpack.c.b16 %v650, %v649
    %v757 = vpack.c.b16 %v652, %v651
    %v758 = vpack.c.b16 %v654, %v653
    %v759 = vpack.c.b16 %v656, %v655
    %v760 = vpack.c.b16 %v658, %v657
    %v761 = vpack.c.b16 %v660, %v659
    %v762 = vpack.c.b16 %v662, %v661
    %v763 = vpack.c.b16 %v664, %v663
    %v764 = vpack.c.b16 %v666, %v665
    %v765 = vpack.c.b16 %v668, %v667
    %v766 = vpack.c.b16 %v670, %v669
    %v767 = vpack.c.b16 %v672, %v671
    %v768 = vpack.c.b16 %v674, %v673
    %v769 = vpack.c.b16 %v676, %v675
    %v770 = vpack.c.b16 %v678, %v677
    %v771 = vpack.c.b16 %v680, %v679
    %v772 = vpack.c.b16 %v682, %v681
    %v773 = vpack.c.b16 %v684, %v683
    %v774 = vpack.c.b16 %v686, %v685
    %v775 = vpack.c.b16 %v688, %v687
    %v776 = vpack.c.b16 %v690, %v689
    %v777 = vpack.c.b16 %v692, %v691
    %v778 = vpack.c.b16 %v694, %v693
    %v779 = vpack.c.b16 %v696, %v695
    %v780 = vpack.c.b16 %v698, %v697
    %v781 = vpack.c.b16 %v700, %v699
    %v782 = vpack.c.b16 %v702, %v701
    %v783 = vpack.c.b16 %v704, %v703
    %v784 = vpack.c.b16 %v706, %v705
    %v785 = vpack.c.b16 %v708, %v707
    %v786 = vpack.c.b16 %v710, %v709
    %v787 = vpack.c.b16 %v712, %v711
    %v788 = vpack.c.b16 %v714, %v713
    %v789 = vpack.c.b16 %v716, %v715
    %v790 = vpack.c.b16 %v718, %v717
    %v791 = vpack.c.b16 %v720, %v719
    %v792 = vpack.c.b16 %v722, %v721
    %v793 = vpack.c.b16 %v724, %v723
    %v794 = vpack.c.b16 %v726, %v725
    %v795 = vpack.c.b16 %v728, %v727
    %v796 = vpack.c.b16 %v730, %v729
    %v797 = vpack.c.b16 %v732, %v731
    %v798 = vpack.c.b16 %v734, %v733
    %863 = vmatprep.subr.bf16.mxu0 0
    %864 = vmatpush1.bf16.msra.mxu0 %v735
    %865 = vmatprep.subr.bf16.mxu0 0
    %866 = vmatpush1.bf16.msra.mxu0 %v736
    %867 = vmatprep.subr.bf16.mxu0 0
    %868 = vmatpush1.bf16.msra.mxu0 %v737
    %869 = vmatprep.subr.bf16.mxu0 0
    %870 = vmatpush1.bf16.msra.mxu0 %v738
    %871 = vmatprep.subr.bf16.mxu0 0
    %872 = vmatpush1.bf16.msra.mxu0 %v739
    %873 = vmatprep.subr.bf16.mxu0 0
    %874 = vmatpush1.bf16.msra.mxu0 %v740
    %875 = vmatprep.subr.bf16.mxu0 0
    %876 = vmatpush1.bf16.msra.mxu0 %v741
    %877 = vmatprep.subr.bf16.mxu0 0
    %878 = vmatpush1.bf16.msra.mxu0 %v742
    %879 = vmatprep.subr.bf16.mxu0 0
    %880 = vmatpush1.bf16.msra.mxu0 %v743
    %881 = vmatprep.subr.bf16.mxu0 0
    %882 = vmatpush1.bf16.msra.mxu0 %v744
    %883 = vmatprep.subr.bf16.mxu0 0
    %884 = vmatpush1.bf16.msra.mxu0 %v745
    %885 = vmatprep.subr.bf16.mxu0 0
    %886 = vmatpush1.bf16.msra.mxu0 %v746
    %887 = vmatprep.subr.bf16.mxu0 0
    %888 = vmatpush1.bf16.msra.mxu0 %v747
    %889 = vmatprep.subr.bf16.mxu0 0
    %890 = vmatpush1.bf16.msra.mxu0 %v748
    %891 = vmatprep.subr.bf16.mxu0 0
    %892 = vmatpush1.bf16.msra.mxu0 %v749
    %893 = vmatprep.subr.bf16.mxu0 0
    %894 = vmatpush1.bf16.msra.mxu0 %v750
    %895 = vmatprep.mubr.bf16.mxu0 %v467
    %896 = vmatmul.mubr.bf16.gmra.mrb[0].mxu0 %v463
    %v897 = vpop.f32.mrb[0].mxu0
    %v898 = vadd.f32 %v325, %v897
    %v899 = vpop.f32.mrb[0].mxu0
    %v900 = vpop.f32.mrb[0].mxu0
    %v901 = vadd.f32 %v325, %v900
    %v902 = vpop.f32.mrb[0].mxu0
    %903 = vdwg.mxu0
    %904 = vmatprep.subr.bf16.mxu0 0
    %905 = vmatpush1.bf16.msra.mxu0 %v751
    %906 = vmatprep.subr.bf16.mxu0 0
    %907 = vmatpush1.bf16.msra.mxu0 %v752
    %908 = vmatprep.subr.bf16.mxu0 0
    %909 = vmatpush1.bf16.msra.mxu0 %v753
    %910 = vmatprep.subr.bf16.mxu0 0
    %911 = vmatpush1.bf16.msra.mxu0 %v754
    %912 = vmatprep.subr.bf16.mxu0 0
    %913 = vmatpush1.bf16.msra.mxu0 %v755
    %914 = vmatprep.subr.bf16.mxu0 0
    %915 = vmatpush1.bf16.msra.mxu0 %v756
    %916 = vmatprep.subr.bf16.mxu0 0
    %917 = vmatpush1.bf16.msra.mxu0 %v757
    %918 = vmatprep.subr.bf16.mxu0 0
    %919 = vmatpush1.bf16.msra.mxu0 %v758
    %920 = vmatprep.subr.bf16.mxu0 0
    %921 = vmatpush1.bf16.msra.mxu0 %v759
    %922 = vmatprep.subr.bf16.mxu0 0
    %923 = vmatpush1.bf16.msra.mxu0 %v760
    %924 = vmatprep.subr.bf16.mxu0 0
    %925 = vmatpush1.bf16.msra.mxu0 %v761
    %926 = vmatprep.subr.bf16.mxu0 0
    %927 = vmatpush1.bf16.msra.mxu0 %v762
    %928 = vmatprep.subr.bf16.mxu0 0
    %929 = vmatpush1.bf16.msra.mxu0 %v763
    %930 = vmatprep.subr.bf16.mxu0 0
    %931 = vmatpush1.bf16.msra.mxu0 %v764
    %932 = vmatprep.subr.bf16.mxu0 0
    %933 = vmatpush1.bf16.msra.mxu0 %v765
    %934 = vmatprep.subr.bf16.mxu0 0
    %935 = vmatpush1.bf16.msra.mxu0 %v766
    %936 = vmatprep.mubr.bf16.mxu0 %v468
    %937 = vmatmul.mubr.bf16.gmra.mrb[0].mxu0 %v464
    %v938 = vpop.f32.mrb[0].mxu0
    %v939 = vadd.f32 %v898, %v938
    %v940 = vpop.f32.mrb[0].mxu0
    %v941 = vpop.f32.mrb[0].mxu0
    %v942 = vadd.f32 %v901, %v941
    %v943 = vpop.f32.mrb[0].mxu0
    %944 = vdwg.mxu0
    %945 = vmatprep.subr.bf16.mxu0 0
    %946 = vmatpush1.bf16.msra.mxu0 %v767
    %947 = vmatprep.subr.bf16.mxu0 0
    %948 = vmatpush1.bf16.msra.mxu0 %v768
    %949 = vmatprep.subr.bf16.mxu0 0
    %950 = vmatpush1.bf16.msra.mxu0 %v769
    %951 = vmatprep.subr.bf16.mxu0 0
    %952 = vmatpush1.bf16.msra.mxu0 %v770
    %953 = vmatprep.subr.bf16.mxu0 0
    %954 = vmatpush1.bf16.msra.mxu0 %v771
    %955 = vmatprep.subr.bf16.mxu0 0
    %956 = vmatpush1.bf16.msra.mxu0 %v772
    %957 = vmatprep.subr.bf16.mxu0 0
    %958 = vmatpush1.bf16.msra.mxu0 %v773
    %959 = vmatprep.subr.bf16.mxu0 0
    %960 = vmatpush1.bf16.msra.mxu0 %v774
    %961 = vmatprep.subr.bf16.mxu0 0
    %962 = vmatpush1.bf16.msra.mxu0 %v775
    %963 = vmatprep.subr.bf16.mxu0 0
    %964 = vmatpush1.bf16.msra.mxu0 %v776
    %965 = vmatprep.subr.bf16.mxu0 0
    %966 = vmatpush1.bf16.msra.mxu0 %v777
    %967 = vmatprep.subr.bf16.mxu0 0
    %968 = vmatpush1.bf16.msra.mxu0 %v778
    %969 = vmatprep.subr.bf16.mxu0 0
    %970 = vmatpush1.bf16.msra.mxu0 %v779
    %971 = vmatprep.subr.bf16.mxu0 0
    %972 = vmatpush1.bf16.msra.mxu0 %v780
    %973 = vmatprep.subr.bf16.mxu0 0
    %974 = vmatpush1.bf16.msra.mxu0 %v781
    %975 = vmatprep.subr.bf16.mxu0 0
    %976 = vmatpush1.bf16.msra.mxu0 %v782
    %977 = vmatprep.mubr.bf16.mxu0 %v469
    %978 = vmatmul.mubr.bf16.gmra.mrb[0].mxu0 %v465
    %v979 = vpop.f32.mrb[0].mxu0
    %v980 = vadd.f32 %v939, %v979
    %v981 = vpop.f32.mrb[0].mxu0
    %v982 = vpop.f32.mrb[0].mxu0
    %v983 = vadd.f32 %v942, %v982
    %v984 = vpop.f32.mrb[0].mxu0
    %985 = vdwg.mxu0
    %986 = vmatprep.subr.bf16.mxu0 0
    %987 = vmatpush1.bf16.msra.mxu0 %v783
    %988 = vmatprep.subr.bf16.mxu0 0
    %989 = vmatpush1.bf16.msra.mxu0 %v784
    %990 = vmatprep.subr.bf16.mxu0 0
    %991 = vmatpush1.bf16.msra.mxu0 %v785
    %992 = vmatprep.subr.bf16.mxu0 0
    %993 = vmatpush1.bf16.msra.mxu0 %v786
    %994 = vmatprep.subr.bf16.mxu0 0
    %995 = vmatpush1.bf16.msra.mxu0 %v787
    %996 = vmatprep.subr.bf16.mxu0 0
    %997 = vmatpush1.bf16.msra.mxu0 %v788
    %998 = vmatprep.subr.bf16.mxu0 0
    %999 = vmatpush1.bf16.msra.mxu0 %v789
    %1000 = vmatprep.subr.bf16.mxu0 0
    %1001 = vmatpush1.bf16.msra.mxu0 %v790
    %1002 = vmatprep.subr.bf16.mxu0 0
    %1003 = vmatpush1.bf16.msra.mxu0 %v791
    %1004 = vmatprep.subr.bf16.mxu0 0
    %1005 = vmatpush1.bf16.msra.mxu0 %v792
    %1006 = vmatprep.subr.bf16.mxu0 0
    %1007 = vmatpush1.bf16.msra.mxu0 %v793
    %1008 = vmatprep.subr.bf16.mxu0 0
    %1009 = vmatpush1.bf16.msra.mxu0 %v794
    %1010 = vmatprep.subr.bf16.mxu0 0
    %1011 = vmatpush1.bf16.msra.mxu0 %v795
    %1012 = vmatprep.subr.bf16.mxu0 0
    %1013 = vmatpush1.bf16.msra.mxu0 %v796
    %1014 = vmatprep.subr.bf16.mxu0 0
    %1015 = vmatpush1.bf16.msra.mxu0 %v797
    %1016 = vmatprep.subr.bf16.mxu0 0
    %1017 = vmatpush1.bf16.msra.mxu0 %v798
    %1018 = vmatprep.mubr.bf16.mxu0 %v470
    %1019 = vmatmul.mubr.bf16.gmra.mrb[0].mxu0 %v466
    %v1020 = vpop.f32.mrb[0].mxu0
    %v1021 = vadd.f32 %v980, %v1020
    %v1022 = vpop.f32.mrb[0].mxu0
    %v1023 = vpop.f32.mrb[0].mxu0
    %v1024 = vadd.f32 %v983, %v1023
    %v1025 = vpop.f32.mrb[0].mxu0
    %1026 = vdwg.mxu0
    %v1027 = vmax.f32 %v1021, 0.0
    %v1028 = vmax.f32 %v1024, 0.0
    %v1029 = vpack.c.bf16 %v1028, %v1027
    %v1030 = vld [vmem:[%s4] sm:$0xf]
    %v1031 = vld [vmem:[%s4 + $0x4] sm:$0xf]
    %v1032 = vld [vmem:[%s4 + $0x8] sm:$0xf]
    %v1033 = vld [vmem:[%s4 + $0xc] sm:$0xf]
    %v1034 = vld [vmem:[%s4 + $0x10] sm:$0xf]
    %v1035 = vld [vmem:[%s4 + $0x14] sm:$0xf]
    %v1036 = vld [vmem:[%s4 + $0x18] sm:$0xf]
    %v1037 = vld [vmem:[%s4 + $0x1c] sm:$0xf]
    %v1038 = vld [vmem:[%s4 + $0x20] sm:$0xf]
    %v1039 = vld [vmem:[%s4 + $0x24] sm:$0xf]
    %v1040 = vld [vmem:[%s4 + $0x28] sm:$0xf]
    %v1041 = vld [vmem:[%s4 + $0x2c] sm:$0xf]
    %v1042 = vld [vmem:[%s4 + $0x30] sm:$0xf]
    %v1043 = vld [vmem:[%s4 + $0x34] sm:$0xf]
    %v1044 = vld [vmem:[%s4 + $0x38] sm:$0xf]
    %v1045 = vld [vmem:[%s4 + $0x3c] sm:$0xf]
    %v1046 = vld [vmem:[%s5] sm:$0x1]
    %v1048 = vlaneseq
    %v1049 = vshrl.u32 %v1048, 7
    %v1050 = vsub.s32 0, %v1049
    %v1051 = vrot.slane %v1046, %v1050
    %v1069 = vunpack.c.l.b16 %v1030
    %v1070 = vunpack.c.l.b16 %v1031
    %v1071 = vunpack.c.l.b16 %v1032
    %v1072 = vunpack.c.l.b16 %v1033
    %v1073 = vunpack.c.l.b16 %v1034
    %v1074 = vunpack.c.l.b16 %v1035
    %v1075 = vunpack.c.l.b16 %v1036
    %v1076 = vunpack.c.l.b16 %v1037
    %v1077 = vunpack.c.l.b16 %v1038
    %v1078 = vunpack.c.l.b16 %v1039
    %v1079 = vunpack.c.l.b16 %v1040
    %v1080 = vunpack.c.l.b16 %v1041
    %v1081 = vunpack.c.l.b16 %v1042
    %v1082 = vunpack.c.l.b16 %v1043
    %v1083 = vunpack.c.l.b16 %v1044
    %v1084 = vunpack.c.l.b16 %v1045
    %v1085 = vpack.c.b16 %v1070, %v1069
    %v1086 = vpack.c.b16 %v1072, %v1071
    %v1087 = vpack.c.b16 %v1074, %v1073
    %v1088 = vpack.c.b16 %v1076, %v1075
    %v1089 = vpack.c.b16 %v1078, %v1077
    %v1090 = vpack.c.b16 %v1080, %v1079
    %v1091 = vpack.c.b16 %v1082, %v1081
    %v1092 = vpack.c.b16 %v1084, %v1083
    %1101 = vmatprep.subr.bf16.mxu0 0
    %1102 = vmatpush1.bf16.msra.mxu0 %v1085
    %1103 = vmatprep.subr.bf16.mxu0 0
    %1104 = vmatpush1.bf16.msra.mxu0 %v1086
    %1105 = vmatprep.subr.bf16.mxu0 0
    %1106 = vmatpush1.bf16.msra.mxu0 %v1087
    %1107 = vmatprep.subr.bf16.mxu0 0
    %1108 = vmatpush1.bf16.msra.mxu0 %v1088
    %1109 = vmatprep.subr.bf16.mxu0 0
    %1110 = vmatpush1.bf16.msra.mxu0 %v1089
    %1111 = vmatprep.subr.bf16.mxu0 0
    %1112 = vmatpush1.bf16.msra.mxu0 %v1090
    %1113 = vmatprep.subr.bf16.mxu0 0
    %1114 = vmatpush1.bf16.msra.mxu0 %v1091
    %1115 = vmatprep.subr.bf16.mxu0 0
    %1116 = vmatpush1.bf16.msra.mxu0 %v1092
    %1117 = vmatprep.subr.bf16.mxu0 0
    %1118 = vmatpush1.bf16.msra.mxu0 0
    %1119 = vmatprep.subr.bf16.mxu0 0
    %1120 = vmatpush1.bf16.msra.mxu0 0
    %1121 = vmatprep.subr.bf16.mxu0 0
    %1122 = vmatpush1.bf16.msra.mxu0 0
    %1123 = vmatprep.subr.bf16.mxu0 0
    %1124 = vmatpush1.bf16.msra.mxu0 0
    %1125 = vmatprep.subr.bf16.mxu0 0
    %1126 = vmatpush1.bf16.msra.mxu0 0
    %1127 = vmatprep.subr.bf16.mxu0 0
    %1128 = vmatpush1.bf16.msra.mxu0 0
    %1129 = vmatprep.subr.bf16.mxu0 0
    %1130 = vmatpush1.bf16.msra.mxu0 0
    %1131 = vmatprep.subr.bf16.mxu0 0
    %1132 = vmatpush1.bf16.msra.mxu0 0
    %1133 = vmatprep.mubr.bf16.mxu0 0
    %1134 = vmatmul.mubr.bf16.gmra.mrb[0].mxu0 %v1029
    %v1135 = vpop.f32.mrb[0].mxu0
    %v1136 = vadd.f32 %v1051, %v1135
    %v1137 = vpop.f32.mrb[0].mxu0
    %v1138 = vpop.f32.mrb[0].mxu0
    %v1139 = vadd.f32 %v1051, %v1138
    %v1140 = vpop.f32.mrb[0].mxu0
    %1141 = vdwg.mxu0
    %v1142 = vmul.f32 %v1136, 1.442695
    %v1143 = vpow.pop %v1142
    %v1144 = vmul.f32 %v1139, 1.442695
    %v1145 = vpow.pop %v1144
    %1148 = vrot.lane.b32.xlu0 %v190, 16
    %v1149 = vpop.permute.xlu0 %1148
    %1150 = vrot.lane.b32.xlu0 %v191, 16
    %v1151 = vpop.permute.xlu0 %1150
    %v1154 = vmul.f32 %v1143, %v1149
    %v1155 = vmul.f32 %v1145, %v1151
    %1158 = vrot.lane.b32.xlu0 %v1154, 112
    %v1159 = vpop.permute.xlu0 %1158
    %1160 = vrot.lane.b32.xlu0 %v1155, 112
    %v1161 = vpop.permute.xlu0 %1160
    %v1164 = vadd.f32 %v1136, %v1159
    %v1165 = vadd.f32 %v1139, %v1161
    %v1166 = vpack.c.bf16 %v1165, %v1164
    %v1167 = vld [vmem:[%s6] sm:$0xf]
    %v1168 = vld [vmem:[%s6 + $0x4] sm:$0xf]
    %v1169 = vld [vmem:[%s7] sm:$0x1]
    %v1171 = vlaneseq
    %v1172 = vshrl.u32 %v1171, 7
    %v1173 = vsub.s32 0, %v1172
    %v1174 = vrot.slane %v1169, %v1173
    %v1178 = vunpack.c.l.b16 %v1167
    %v1179 = vunpack.c.l.b16 %v1168
    %v1180 = vpack.c.b16 %v1179, %v1178
    %vm1182 = vcmask 130048
    %v1184 = vsel %vm1182, %v1166, 0
    %1186 = vmatprep.subr.bf16.mxu0 0
    %1187 = vmatpush1.bf16.msra.mxu0 %v1180
    %1188 = vmatprep.subr.bf16.mxu0 0
    %1189 = vmatpush1.bf16.msra.mxu0 0
    %1190 = vmatprep.subr.bf16.mxu0 0
    %1191 = vmatpush1.bf16.msra.mxu0 0
    %1192 = vmatprep.subr.bf16.mxu0 0
    %1193 = vmatpush1.bf16.msra.mxu0 0
    %1194 = vmatprep.subr.bf16.mxu0 0
    %1195 = vmatpush1.bf16.msra.mxu0 0
    %1196 = vmatprep.subr.bf16.mxu0 0
    %1197 = vmatpush1.bf16.msra.mxu0 0
    %1198 = vmatprep.subr.bf16.mxu0 0
    %1199 = vmatpush1.bf16.msra.mxu0 0
    %1200 = vmatprep.subr.bf16.mxu0 0
    %1201 = vmatpush1.bf16.msra.mxu0 0
    %1202 = vmatprep.subr.bf16.mxu0 0
    %1203 = vmatpush1.bf16.msra.mxu0 0
    %1204 = vmatprep.subr.bf16.mxu0 0
    %1205 = vmatpush1.bf16.msra.mxu0 0
    %1206 = vmatprep.subr.bf16.mxu0 0
    %1207 = vmatpush1.bf16.msra.mxu0 0
    %1208 = vmatprep.subr.bf16.mxu0 0
    %1209 = vmatpush1.bf16.msra.mxu0 0
    %1210 = vmatprep.subr.bf16.mxu0 0
    %1211 = vmatpush1.bf16.msra.mxu0 0
    %1212 = vmatprep.subr.bf16.mxu0 0
    %1213 = vmatpush1.bf16.msra.mxu0 0
    %1214 = vmatprep.subr.bf16.mxu0 0
    %1215 = vmatpush1.bf16.msra.mxu0 0
    %1216 = vmatprep.subr.bf16.mxu0 0
    %1217 = vmatpush1.bf16.msra.mxu0 0
    %1218 = vmatprep.mubr.bf16.mxu0 0
    %1219 = vmatmul.mubr.bf16.gmra.mrb[0].mxu0 %v1184
    %v1220 = vpop.f32.mrb[0].mxu0
    %v1221 = vadd.f32 %v1174, %v1220
    %v1222 = vpop.f32.mrb[0].mxu0
    %v1223 = vpop.f32.mrb[0].mxu0
    %v1224 = vadd.f32 %v1174, %v1223
    %v1225 = vpop.f32.mrb[0].mxu0
    %1226 = vdwg.mxu0
    %v1227 = vmax.f32 %v1221, 0.0
    %v1228 = vmax.f32 %v1224, 0.0
    %v1229 = vpack.c.bf16 %v1228, %v1227
    %v1230 = vld [vmem:[#allocation5] sm:$0xff]
    %v1231 = vld [vmem:[#allocation5 + $0x8] sm:$0xff]
    %v1232 = vld [vmem:[#allocation5 + $0x10] sm:$0xff]
    %v1233 = vld [vmem:[#allocation5 + $0x18] sm:$0xff]
    %v1234 = vld [vmem:[#allocation5 + $0x20] sm:$0xff]
    %v1235 = vld [vmem:[#allocation5 + $0x28] sm:$0xff]
    %v1236 = vld [vmem:[#allocation5 + $0x30] sm:$0xff]
    %v1237 = vld [vmem:[#allocation5 + $0x38] sm:$0xff]
    %v1238 = vld [vmem:[#allocation5 + $0x40] sm:$0xff]
    %v1239 = vld [vmem:[#allocation5 + $0x48] sm:$0xff]
    %v1240 = vld [vmem:[#allocation5 + $0x50] sm:$0xff]
    %v1241 = vld [vmem:[#allocation5 + $0x58] sm:$0xff]
    %v1242 = vld [vmem:[#allocation5 + $0x60] sm:$0xff]
    %v1243 = vld [vmem:[#allocation5 + $0x68] sm:$0xff]
    %v1244 = vld [vmem:[#allocation5 + $0x70] sm:$0xff]
    %v1245 = vld [vmem:[#allocation5 + $0x78] sm:$0xff]
    %v1246 = vld [vmem:[#allocation5 + $0x80] sm:$0xff]
    %v1247 = vld [vmem:[#allocation5 + $0x88] sm:$0xff]
    %v1248 = vld [vmem:[#allocation5 + $0x90] sm:$0xff]
    %v1249 = vld [vmem:[#allocation5 + $0x98] sm:$0xff]
    %v1250 = vld [vmem:[#allocation5 + $0xa0] sm:$0xff]
    %v1251 = vld [vmem:[#allocation5 + $0xa8] sm:$0xff]
    %v1252 = vld [vmem:[#allocation5 + $0xb0] sm:$0xff]
    %v1253 = vld [vmem:[#allocation5 + $0xb8] sm:$0xff]
    %v1254 = vld [vmem:[#allocation5 + $0xc0] sm:$0xff]
    %v1255 = vld [vmem:[#allocation5 + $0xc8] sm:$0xff]
    %v1256 = vld [vmem:[#allocation5 + $0xd0] sm:$0xff]
    %v1257 = vld [vmem:[#allocation5 + $0xd8] sm:$0xff]
    %v1258 = vld [vmem:[#allocation5 + $0xe0] sm:$0xff]
    %v1259 = vld [vmem:[#allocation5 + $0xe8] sm:$0xff]
    %v1260 = vld [vmem:[#allocation5 + $0xf0] sm:$0xff]
    %v1261 = vld [vmem:[#allocation5 + $0xf8] sm:$0xff]
    %v1262 = vld [vmem:[#allocation5 + $0x100] sm:$0xff]
    %v1263 = vld [vmem:[#allocation5 + $0x108] sm:$0xff]
    %v1264 = vld [vmem:[#allocation5 + $0x110] sm:$0xff]
    %v1265 = vld [vmem:[#allocation5 + $0x118] sm:$0xff]
    %v1266 = vld [vmem:[#allocation5 + $0x120] sm:$0xff]
    %v1267 = vld [vmem:[#allocation5 + $0x128] sm:$0xff]
    %v1268 = vld [vmem:[#allocation5 + $0x130] sm:$0xff]
    %v1269 = vld [vmem:[#allocation5 + $0x138] sm:$0xff]
    %v1270 = vld [vmem:[#allocation5 + $0x140] sm:$0xff]
    %v1271 = vld [vmem:[#allocation5 + $0x148] sm:$0xff]
    %v1272 = vld [vmem:[#allocation5 + $0x150] sm:$0xff]
    %v1273 = vld [vmem:[#allocation5 + $0x158] sm:$0xff]
    %v1274 = vld [vmem:[#allocation5 + $0x160] sm:$0xff]
    %v1275 = vld [vmem:[#allocation5 + $0x168] sm:$0xff]
    %v1276 = vld [vmem:[#allocation5 + $0x170] sm:$0xff]
    %v1277 = vld [vmem:[#allocation5 + $0x178] sm:$0xff]
    %v1278 = vld [vmem:[#allocation5 + $0x180] sm:$0xff]
    %v1279 = vld [vmem:[#allocation5 + $0x188] sm:$0xff]
    %v1280 = vld [vmem:[#allocation5 + $0x190] sm:$0xff]
    %v1281 = vld [vmem:[#allocation5 + $0x198] sm:$0xff]
    %v1282 = vld [vmem:[#allocation5 + $0x1a0] sm:$0xff]
    %v1283 = vld [vmem:[#allocation5 + $0x1a8] sm:$0xff]
    %v1284 = vld [vmem:[#allocation5 + $0x1b0] sm:$0xff]
    %v1285 = vld [vmem:[#allocation5 + $0x1b8] sm:$0xff]
    %v1286 = vld [vmem:[#allocation5 + $0x1c0] sm:$0xff]
    %v1287 = vld [vmem:[#allocation5 + $0x1c8] sm:$0xff]
    %v1288 = vld [vmem:[#allocation5 + $0x1d0] sm:$0xff]
    %v1289 = vld [vmem:[#allocation5 + $0x1d8] sm:$0xff]
    %v1290 = vld [vmem:[#allocation5 + $0x1e0] sm:$0xff]
    %v1291 = vld [vmem:[#allocation5 + $0x1e8] sm:$0xff]
    %v1292 = vld [vmem:[#allocation5 + $0x1f0] sm:$0xff]
    %v1293 = vld [vmem:[#allocation5 + $0x1f8] sm:$0xff]
    %v1294 = vld [vmem:[%s9] sm:$0xff]
    %v1296 = vlaneseq
    %v1297 = vshrl.u32 %v1296, 7
    %v1298 = vsub.s32 0, %v1297
    %v1299 = vrot.slane %v1294, %v1298
    %v1300 = vlaneseq
    %v1301 = vshrl.u32 %v1300, 7
    %v1302 = vsub.s32 1, %v1301
    %v1303 = vrot.slane %v1294, %v1302
    %v1304 = vlaneseq
    %v1305 = vshrl.u32 %v1304, 7
    %v1306 = vsub.s32 2, %v1305
    %v1307 = vrot.slane %v1294, %v1306
    %v1308 = vlaneseq
    %v1309 = vshrl.u32 %v1308, 7
    %v1310 = vsub.s32 3, %v1309
    %v1311 = vrot.slane %v1294, %v1310
    %v1312 = vlaneseq
    %v1313 = vshrl.u32 %v1312, 7
    %v1314 = vsub.s32 4, %v1313
    %v1315 = vrot.slane %v1294, %v1314
    %v1316 = vlaneseq
    %v1317 = vshrl.u32 %v1316, 7
    %v1318 = vsub.s32 5, %v1317
    %v1319 = vrot.slane %v1294, %v1318
    %v1320 = vlaneseq
    %v1321 = vshrl.u32 %v1320, 7
    %v1322 = vsub.s32 6, %v1321
    %v1323 = vrot.slane %v1294, %v1322
    %v1324 = vlaneseq
    %v1325 = vshrl.u32 %v1324, 7
    %v1326 = vsub.s32 7, %v1325
    %v1327 = vrot.slane %v1294, %v1326
    %v1400 = vunpack.c.l.b16 %v1230
    %v1401 = vunpack.c.h.b16 %v1230
    %v1402 = vunpack.c.l.b16 %v1231
    %v1403 = vunpack.c.h.b16 %v1231
    %v1404 = vunpack.c.l.b16 %v1232
    %v1405 = vunpack.c.h.b16 %v1232
    %v1406 = vunpack.c.l.b16 %v1233
    %v1407 = vunpack.c.h.b16 %v1233
    %v1408 = vunpack.c.l.b16 %v1234
    %v1409 = vunpack.c.h.b16 %v1234
    %v1410 = vunpack.c.l.b16 %v1235
    %v1411 = vunpack.c.h.b16 %v1235
    %v1412 = vunpack.c.l.b16 %v1236
    %v1413 = vunpack.c.h.b16 %v1236
    %v1414 = vunpack.c.l.b16 %v1237
    %v1415 = vunpack.c.h.b16 %v1237
    %v1416 = vunpack.c.l.b16 %v1238
    %v1417 = vunpack.c.h.b16 %v1238
    %v1418 = vunpack.c.l.b16 %v1239
    %v1419 = vunpack.c.h.b16 %v1239
    %v1420 = vunpack.c.l.b16 %v1240
    %v1421 = vunpack.c.h.b16 %v1240
    %v1422 = vunpack.c.l.b16 %v1241
    %v1423 = vunpack.c.h.b16 %v1241
    %v1424 = vunpack.c.l.b16 %v1242
    %v1425 = vunpack.c.h.b16 %v1242
    %v1426 = vunpack.c.l.b16 %v1243
    %v1427 = vunpack.c.h.b16 %v1243
    %v1428 = vunpack.c.l.b16 %v1244
    %v1429 = vunpack.c.h.b16 %v1244
    %v1430 = vunpack.c.l.b16 %v1245
    %v1431 = vunpack.c.h.b16 %v1245
    %v1432 = vunpack.c.l.b16 %v1246
    %v1433 = vunpack.c.h.b16 %v1246
    %v1434 = vunpack.c.l.b16 %v1247
    %v1435 = vunpack.c.h.b16 %v1247
    %v1436 = vunpack.c.l.b16 %v1248
    %v1437 = vunpack.c.h.b16 %v1248
    %v1438 = vunpack.c.l.b16 %v1249
    %v1439 = vunpack.c.h.b16 %v1249
    %v1440 = vunpack.c.l.b16 %v1250
    %v1441 = vunpack.c.h.b16 %v1250
    %v1442 = vunpack.c.l.b16 %v1251
    %v1443 = vunpack.c.h.b16 %v1251
    %v1444 = vunpack.c.l.b16 %v1252
    %v1445 = vunpack.c.h.b16 %v1252
    %v1446 = vunpack.c.l.b16 %v1253
    %v1447 = vunpack.c.h.b16 %v1253
    %v1448 = vunpack.c.l.b16 %v1254
    %v1449 = vunpack.c.h.b16 %v1254
    %v1450 = vunpack.c.l.b16 %v1255
    %v1451 = vunpack.c.h.b16 %v1255
    %v1452 = vunpack.c.l.b16 %v1256
    %v1453 = vunpack.c.h.b16 %v1256
    %v1454 = vunpack.c.l.b16 %v1257
    %v1455 = vunpack.c.h.b16 %v1257
    %v1456 = vunpack.c.l.b16 %v1258
    %v1457 = vunpack.c.h.b16 %v1258
    %v1458 = vunpack.c.l.b16 %v1259
    %v1459 = vunpack.c.h.b16 %v1259
    %v1460 = vunpack.c.l.b16 %v1260
    %v1461 = vunpack.c.h.b16 %v1260
    %v1462 = vunpack.c.l.b16 %v1261
    %v1463 = vunpack.c.h.b16 %v1261
    %v1464 = vunpack.c.l.b16 %v1262
    %v1465 = vunpack.c.h.b16 %v1262
    %v1466 = vunpack.c.l.b16 %v1263
    %v1467 = vunpack.c.h.b16 %v1263
    %v1468 = vunpack.c.l.b16 %v1264
    %v1469 = vunpack.c.h.b16 %v1264
    %v1470 = vunpack.c.l.b16 %v1265
    %v1471 = vunpack.c.h.b16 %v1265
    %v1472 = vunpack.c.l.b16 %v1266
    %v1473 = vunpack.c.h.b16 %v1266
    %v1474 = vunpack.c.l.b16 %v1267
    %v1475 = vunpack.c.h.b16 %v1267
    %v1476 = vunpack.c.l.b16 %v1268
    %v1477 = vunpack.c.h.b16 %v1268
    %v1478 = vunpack.c.l.b16 %v1269
    %v1479 = vunpack.c.h.b16 %v1269
    %v1480 = vunpack.c.l.b16 %v1270
    %v1481 = vunpack.c.h.b16 %v1270
    %v1482 = vunpack.c.l.b16 %v1271
    %v1483 = vunpack.c.h.b16 %v1271
    %v1484 = vunpack.c.l.b16 %v1272
    %v1485 = vunpack.c.h.b16 %v1272
    %v1486 = vunpack.c.l.b16 %v1273
    %v1487 = vunpack.c.h.b16 %v1273
    %v1488 = vunpack.c.l.b16 %v1274
    %v1489 = vunpack.c.h.b16 %v1274
    %v1490 = vunpack.c.l.b16 %v1275
    %v1491 = vunpack.c.h.b16 %v1275
    %v1492 = vunpack.c.l.b16 %v1276
    %v1493 = vunpack.c.h.b16 %v1276
    %v1494 = vunpack.c.l.b16 %v1277
    %v1495 = vunpack.c.h.b16 %v1277
    %v1496 = vunpack.c.l.b16 %v1278
    %v1497 = vunpack.c.h.b16 %v1278
    %v1498 = vunpack.c.l.b16 %v1279
    %v1499 = vunpack.c.h.b16 %v1279
    %v1500 = vunpack.c.l.b16 %v1280
    %v1501 = vunpack.c.h.b16 %v1280
    %v1502 = vunpack.c.l.b16 %v1281
    %v1503 = vunpack.c.h.b16 %v1281
    %v1504 = vunpack.c.l.b16 %v1282
    %v1505 = vunpack.c.h.b16 %v1282
    %v1506 = vunpack.c.l.b16 %v1283
    %v1507 = vunpack.c.h.b16 %v1283
    %v1508 = vunpack.c.l.b16 %v1284
    %v1509 = vunpack.c.h.b16 %v1284
    %v1510 = vunpack.c.l.b16 %v1285
    %v1511 = vunpack.c.h.b16 %v1285
    %v1512 = vunpack.c.l.b16 %v1286
    %v1513 = vunpack.c.h.b16 %v1286
    %v1514 = vunpack.c.l.b16 %v1287
    %v1515 = vunpack.c.h.b16 %v1287
    %v1516 = vunpack.c.l.b16 %v1288
    %v1517 = vunpack.c.h.b16 %v1288
    %v1518 = vunpack.c.l.b16 %v1289
    %v1519 = vunpack.c.h.b16 %v1289
    %v1520 = vunpack.c.l.b16 %v1290
    %v1521 = vunpack.c.h.b16 %v1290
    %v1522 = vunpack.c.l.b16 %v1291
    %v1523 = vunpack.c.h.b16 %v1291
    %v1524 = vunpack.c.l.b16 %v1292
    %v1525 = vunpack.c.h.b16 %v1292
    %v1526 = vunpack.c.l.b16 %v1293
    %v1527 = vunpack.c.h.b16 %v1293
    %v1528 = vpack.c.b16 %v1408, %v1400
    %v1529 = vpack.c.b16 %v1409, %v1401
    %v1530 = vpack.c.b16 %v1410, %v1402
    %v1531 = vpack.c.b16 %v1411, %v1403
    %v1532 = vpack.c.b16 %v1412, %v1404
    %v1533 = vpack.c.b16 %v1413, %v1405
    %v1534 = vpack.c.b16 %v1414, %v1406
    %v1535 = vpack.c.b16 %v1415, %v1407
    %v1536 = vpack.c.b16 %v1424, %v1416
    %v1537 = vpack.c.b16 %v1425, %v1417
    %v1538 = vpack.c.b16 %v1426, %v1418
    %v1539 = vpack.c.b16 %v1427, %v1419
    %v1540 = vpack.c.b16 %v1428, %v1420
    %v1541 = vpack.c.b16 %v1429, %v1421
    %v1542 = vpack.c.b16 %v1430, %v1422
    %v1543 = vpack.c.b16 %v1431, %v1423
    %v1544 = vpack.c.b16 %v1440, %v1432
    %v1545 = vpack.c.b16 %v1441, %v1433
    %v1546 = vpack.c.b16 %v1442, %v1434
    %v1547 = vpack.c.b16 %v1443, %v1435
    %v1548 = vpack.c.b16 %v1444, %v1436
    %v1549 = vpack.c.b16 %v1445, %v1437
    %v1550 = vpack.c.b16 %v1446, %v1438
    %v1551 = vpack.c.b16 %v1447, %v1439
    %v1552 = vpack.c.b16 %v1456, %v1448
    %v1553 = vpack.c.b16 %v1457, %v1449
    %v1554 = vpack.c.b16 %v1458, %v1450
    %v1555 = vpack.c.b16 %v1459, %v1451
    %v1556 = vpack.c.b16 %v1460, %v1452
    %v1557 = vpack.c.b16 %v1461, %v1453
    %v1558 = vpack.c.b16 %v1462, %v1454
    %v1559 = vpack.c.b16 %v1463, %v1455
    %v1560 = vpack.c.b16 %v1472, %v1464
    %v1561 = vpack.c.b16 %v1473, %v1465
    %v1562 = vpack.c.b16 %v1474, %v1466
    %v1563 = vpack.c.b16 %v1475, %v1467
    %v1564 = vpack.c.b16 %v1476, %v1468
    %v1565 = vpack.c.b16 %v1477, %v1469
    %v1566 = vpack.c.b16 %v1478, %v1470
    %v1567 = vpack.c.b16 %v1479, %v1471
    %v1568 = vpack.c.b16 %v1488, %v1480
    %v1569 = vpack.c.b16 %v1489, %v1481
    %v1570 = vpack.c.b16 %v1490, %v1482
    %v1571 = vpack.c.b16 %v1491, %v1483
    %v1572 = vpack.c.b16 %v1492, %v1484
    %v1573 = vpack.c.b16 %v1493, %v1485
    %v1574 = vpack.c.b16 %v1494, %v1486
    %v1575 = vpack.c.b16 %v1495, %v1487
    %v1576 = vpack.c.b16 %v1504, %v1496
    %v1577 = vpack.c.b16 %v1505, %v1497
    %v1578 = vpack.c.b16 %v1506, %v1498
    %v1579 = vpack.c.b16 %v1507, %v1499
    %v1580 = vpack.c.b16 %v1508, %v1500
    %v1581 = vpack.c.b16 %v1509, %v1501
    %v1582 = vpack.c.b16 %v1510, %v1502
    %v1583 = vpack.c.b16 %v1511, %v1503
    %v1584 = vpack.c.b16 %v1520, %v1512
    %v1585 = vpack.c.b16 %v1521, %v1513
    %v1586 = vpack.c.b16 %v1522, %v1514
    %v1587 = vpack.c.b16 %v1523, %v1515
    %v1588 = vpack.c.b16 %v1524, %v1516
    %v1589 = vpack.c.b16 %v1525, %v1517
    %v1590 = vpack.c.b16 %v1526, %v1518
    %v1591 = vpack.c.b16 %v1527, %v1519
    %1656 = vmatprep.subr.bf16.mxu0 %v1529
    %1657 = vmatpush1.bf16.msra.mxu0 %v1528
    %1658 = vmatprep.subr.bf16.mxu0 %v1537
    %1659 = vmatpush1.bf16.msra.mxu0 %v1536
    %1660 = vmatprep.subr.bf16.mxu0 %v1545
    %1661 = vmatpush1.bf16.msra.mxu0 %v1544
    %1662 = vmatprep.subr.bf16.mxu0 %v1553
    %1663 = vmatpush1.bf16.msra.mxu0 %v1552
    %1664 = vmatprep.subr.bf16.mxu0 %v1561
    %1665 = vmatpush1.bf16.msra.mxu0 %v1560
    %1666 = vmatprep.subr.bf16.mxu0 %v1569
    %1667 = vmatpush1.bf16.msra.mxu0 %v1568
    %1668 = vmatprep.subr.bf16.mxu0 %v1577
    %1669 = vmatpush1.bf16.msra.mxu0 %v1576
    %1670 = vmatprep.subr.bf16.mxu0 %v1585
    %1671 = vmatpush1.bf16.msra.mxu0 %v1584
    %1672 = vmatprep.subr.bf16.mxu0 0
    %1673 = vmatpush1.bf16.msra.mxu0 0
    %1674 = vmatprep.subr.bf16.mxu0 0
    %1675 = vmatpush1.bf16.msra.mxu0 0
    %1676 = vmatprep.subr.bf16.mxu0 0
    %1677 = vmatpush1.bf16.msra.mxu0 0
    %1678 = vmatprep.subr.bf16.mxu0 0
    %1679 = vmatpush1.bf16.msra.mxu0 0
    %1680 = vmatprep.subr.bf16.mxu0 0
    %1681 = vmatpush1.bf16.msra.mxu0 0
    %1682 = vmatprep.subr.bf16.mxu0 0
    %1683 = vmatpush1.bf16.msra.mxu0 0
    %1684 = vmatprep.subr.bf16.mxu0 0
    %1685 = vmatpush1.bf16.msra.mxu0 0
    %1686 = vmatprep.subr.bf16.mxu0 0
    %1687 = vmatpush1.bf16.msra.mxu0 0
    %1688 = vmatprep.mubr.bf16.mxu0 0
    %1689 = vmatmul.mubr.bf16.gmra.mrb[0].mxu0 %v1229
    %v1690 = vpop.f32.mrb[0].mxu0
    %v1691 = vadd.f32 %v1299, %v1690
    %v1692 = vpop.f32.mrb[0].mxu0
    %v1693 = vadd.f32 %v1303, %v1692
    %v1694 = vpop.f32.mrb[0].mxu0
    %v1695 = vadd.f32 %v1299, %v1694
    %v1696 = vpop.f32.mrb[0].mxu0
    %v1697 = vadd.f32 %v1303, %v1696
    %1698 = vdwg.mxu0
    %1699 = vmatprep.subr.bf16.mxu0 %v1531
    %1700 = vmatpush1.bf16.msra.mxu0 %v1530
    %1701 = vmatprep.subr.bf16.mxu0 %v1539
    %1702 = vmatpush1.bf16.msra.mxu0 %v1538
    %1703 = vmatprep.subr.bf16.mxu0 %v1547
    %1704 = vmatpush1.bf16.msra.mxu0 %v1546
    %1705 = vmatprep.subr.bf16.mxu0 %v1555
    %1706 = vmatpush1.bf16.msra.mxu0 %v1554
    %1707 = vmatprep.subr.bf16.mxu0 %v1563
    %1708 = vmatpush1.bf16.msra.mxu0 %v1562
    %1709 = vmatprep.subr.bf16.mxu0 %v1571
    %1710 = vmatpush1.bf16.msra.mxu0 %v1570
    %1711 = vmatprep.subr.bf16.mxu0 %v1579
    %1712 = vmatpush1.bf16.msra.mxu0 %v1578
    %1713 = vmatprep.subr.bf16.mxu0 %v1587
    %1714 = vmatpush1.bf16.msra.mxu0 %v1586
    %1715 = vmatprep.subr.bf16.mxu0 0
    %1716 = vmatpush1.bf16.msra.mxu0 0
    %1717 = vmatprep.subr.bf16.mxu0 0
    %1718 = vmatpush1.bf16.msra.mxu0 0
    %1719 = vmatprep.subr.bf16.mxu0 0
    %1720 = vmatpush1.bf16.msra.mxu0 0
    %1721 = vmatprep.subr.bf16.mxu0 0
    %1722 = vmatpush1.bf16.msra.mxu0 0
    %1723 = vmatprep.subr.bf16.mxu0 0
    %1724 = vmatpush1.bf16.msra.mxu0 0
    %1725 = vmatprep.subr.bf16.mxu0 0
    %1726 = vmatpush1.bf16.msra.mxu0 0
    %1727 = vmatprep.subr.bf16.mxu0 0
    %1728 = vmatpush1.bf16.msra.mxu0 0
    %1729 = vmatprep.subr.bf16.mxu0 0
    %1730 = vmatpush1.bf16.msra.mxu0 0
    %1731 = vmatprep.mubr.bf16.mxu0 0
    %1732 = vmatmul.mubr.bf16.gmra.mrb[0].mxu0 %v1229
    %v1733 = vpop.f32.mrb[0].mxu0
    %v1734 = vadd.f32 %v1307, %v1733
    %v1735 = vpop.f32.mrb[0].mxu0
    %v1736 = vadd.f32 %v1311, %v1735
    %v1737 = vpop.f32.mrb[0].mxu0
    %v1738 = vadd.f32 %v1307, %v1737
    %v1739 = vpop.f32.mrb[0].mxu0
    %v1740 = vadd.f32 %v1311, %v1739
    %1741 = vdwg.mxu0
    %1742 = vmatprep.subr.bf16.mxu0 %v1533
    %1743 = vmatpush1.bf16.msra.mxu0 %v1532
    %1744 = vmatprep.subr.bf16.mxu0 %v1541
    %1745 = vmatpush1.bf16.msra.mxu0 %v1540
    %1746 = vmatprep.subr.bf16.mxu0 %v1549
    %1747 = vmatpush1.bf16.msra.mxu0 %v1548
    %1748 = vmatprep.subr.bf16.mxu0 %v1557
    %1749 = vmatpush1.bf16.msra.mxu0 %v1556
    %1750 = vmatprep.subr.bf16.mxu0 %v1565
    %1751 = vmatpush1.bf16.msra.mxu0 %v1564
    %1752 = vmatprep.subr.bf16.mxu0 %v1573
    %1753 = vmatpush1.bf16.msra.mxu0 %v1572
    %1754 = vmatprep.subr.bf16.mxu0 %v1581
    %1755 = vmatpush1.bf16.msra.mxu0 %v1580
    %1756 = vmatprep.subr.bf16.mxu0 %v1589
    %1757 = vmatpush1.bf16.msra.mxu0 %v1588
    %1758 = vmatprep.subr.bf16.mxu0 0
    %1759 = vmatpush1.bf16.msra.mxu0 0
    %1760 = vmatprep.subr.bf16.mxu0 0
    %1761 = vmatpush1.bf16.msra.mxu0 0
    %1762 = vmatprep.subr.bf16.mxu0 0
    %1763 = vmatpush1.bf16.msra.mxu0 0
    %1764 = vmatprep.subr.bf16.mxu0 0
    %1765 = vmatpush1.bf16.msra.mxu0 0
    %1766 = vmatprep.subr.bf16.mxu0 0
    %1767 = vmatpush1.bf16.msra.mxu0 0
    %1768 = vmatprep.subr.bf16.mxu0 0
    %1769 = vmatpush1.bf16.msra.mxu0 0
    %1770 = vmatprep.subr.bf16.mxu0 0
    %1771 = vmatpush1.bf16.msra.mxu0 0
    %1772 = vmatprep.subr.bf16.mxu0 0
    %1773 = vmatpush1.bf16.msra.mxu0 0
    %1774 = vmatprep.mubr.bf16.mxu0 0
    %1775 = vmatmul.mubr.bf16.gmra.mrb[0].mxu0 %v1229
    %v1776 = vpop.f32.mrb[0].mxu0
    %v1777 = vadd.f32 %v1315, %v1776
    %v1778 = vpop.f32.mrb[0].mxu0
    %v1779 = vadd.f32 %v1319, %v1778
    %v1780 = vpop.f32.mrb[0].mxu0
    %v1781 = vadd.f32 %v1315, %v1780
    %v1782 = vpop.f32.mrb[0].mxu0
    %v1783 = vadd.f32 %v1319, %v1782
    %1784 = vdwg.mxu0
    %1785 = vmatprep.subr.bf16.mxu0 %v1535
    %1786 = vmatpush1.bf16.msra.mxu0 %v1534
    %1787 = vmatprep.subr.bf16.mxu0 %v1543
    %1788 = vmatpush1.bf16.msra.mxu0 %v1542
    %1789 = vmatprep.subr.bf16.mxu0 %v1551
    %1790 = vmatpush1.bf16.msra.mxu0 %v1550
    %1791 = vmatprep.subr.bf16.mxu0 %v1559
    %1792 = vmatpush1.bf16.msra.mxu0 %v1558
    %1793 = vmatprep.subr.bf16.mxu0 %v1567
    %1794 = vmatpush1.bf16.msra.mxu0 %v1566
    %1795 = vmatprep.subr.bf16.mxu0 %v1575
    %1796 = vmatpush1.bf16.msra.mxu0 %v1574
    %1797 = vmatprep.subr.bf16.mxu0 %v1583
    %1798 = vmatpush1.bf16.msra.mxu0 %v1582
    %1799 = vmatprep.subr.bf16.mxu0 %v1591
    %1800 = vmatpush1.bf16.msra.mxu0 %v1590
    %1801 = vmatprep.subr.bf16.mxu0 0
    %1802 = vmatpush1.bf16.msra.mxu0 0
    %1803 = vmatprep.subr.bf16.mxu0 0
    %1804 = vmatpush1.bf16.msra.mxu0 0
    %1805 = vmatprep.subr.bf16.mxu0 0
    %1806 = vmatpush1.bf16.msra.mxu0 0
    %1807 = vmatprep.subr.bf16.mxu0 0
    %1808 = vmatpush1.bf16.msra.mxu0 0
    %1809 = vmatprep.subr.bf16.mxu0 0
    %1810 = vmatpush1.bf16.msra.mxu0 0
    %1811 = vmatprep.subr.bf16.mxu0 0
    %1812 = vmatpush1.bf16.msra.mxu0 0
    %1813 = vmatprep.subr.bf16.mxu0 0
    %1814 = vmatpush1.bf16.msra.mxu0 0
    %1815 = vmatprep.subr.bf16.mxu0 0
    %1816 = vmatpush1.bf16.msra.mxu0 0
    %1817 = vmatprep.mubr.bf16.mxu0 0
    %1818 = vmatmul.mubr.bf16.gmra.mrb[0].mxu0 %v1229
    %v1819 = vpop.f32.mrb[0].mxu0
    %v1820 = vadd.f32 %v1323, %v1819
    %v1821 = vpop.f32.mrb[0].mxu0
    %v1822 = vadd.f32 %v1327, %v1821
    %v1823 = vpop.f32.mrb[0].mxu0
    %v1824 = vadd.f32 %v1323, %v1823
    %v1825 = vpop.f32.mrb[0].mxu0
    %v1826 = vadd.f32 %v1327, %v1825
    %1827 = vdwg.mxu0
    %v1828 = vunpack.c.l.bf16 %v182
    %v1829 = vunpack.c.h.bf16 %v182
    %v1830 = vunpack.c.l.bf16 %v183
    %v1831 = vunpack.c.h.bf16 %v183
    %v1832 = vunpack.c.l.bf16 %v184
    %v1833 = vunpack.c.h.bf16 %v184
    %v1834 = vunpack.c.l.bf16 %v185
    %v1835 = vunpack.c.h.bf16 %v185
    %v1836 = vunpack.c.l.bf16 %v186
    %v1837 = vunpack.c.h.bf16 %v186
    %v1838 = vunpack.c.l.bf16 %v187
    %v1839 = vunpack.c.h.bf16 %v187
    %v1840 = vunpack.c.l.bf16 %v188
    %v1841 = vunpack.c.h.bf16 %v188
    %v1842 = vunpack.c.l.bf16 %v189
    %v1843 = vunpack.c.h.bf16 %v189
    %v1844 = vmax.f32 %v1691, 0.0
    %v1845 = vmax.f32 %v1693, 0.0
    %v1846 = vmax.f32 %v1734, 0.0
    %v1847 = vmax.f32 %v1736, 0.0
    %v1848 = vmax.f32 %v1777, 0.0
    %v1849 = vmax.f32 %v1779, 0.0
    %v1850 = vmax.f32 %v1820, 0.0
    %v1851 = vmax.f32 %v1822, 0.0
    %v1852 = vmax.f32 %v1695, 0.0
    %v1853 = vmax.f32 %v1697, 0.0
    %v1854 = vmax.f32 %v1738, 0.0
    %v1855 = vmax.f32 %v1740, 0.0
    %v1856 = vmax.f32 %v1781, 0.0
    %v1857 = vmax.f32 %v1783, 0.0
    %v1858 = vmax.f32 %v1824, 0.0
    %v1859 = vmax.f32 %v1826, 0.0
    %v1860 = vand.u32 2147483647, %v1691
    %v1861 = vand.u32 2147483647, %v1693
    %v1862 = vand.u32 2147483647, %v1734
    %v1863 = vand.u32 2147483647, %v1736
    %v1864 = vand.u32 2147483647, %v1777
    %v1865 = vand.u32 2147483647, %v1779
    %v1866 = vand.u32 2147483647, %v1820
    %v1867 = vand.u32 2147483647, %v1822
    %v1868 = vand.u32 2147483647, %v1695
    %v1869 = vand.u32 2147483647, %v1697
    %v1870 = vand.u32 2147483647, %v1738
    %v1871 = vand.u32 2147483647, %v1740
    %v1872 = vand.u32 2147483647, %v1781
    %v1873 = vand.u32 2147483647, %v1783
    %v1874 = vand.u32 2147483647, %v1824
    %v1875 = vand.u32 2147483647, %v1826
    %v1876 = vsub.f32 0.0, %v1860
    %v1877 = vsub.f32 0.0, %v1861
    %v1878 = vsub.f32 0.0, %v1862
    %v1879 = vsub.f32 0.0, %v1863
    %v1880 = vsub.f32 0.0, %v1864
    %v1881 = vsub.f32 0.0, %v1865
    %v1882 = vsub.f32 0.0, %v1866
    %v1883 = vsub.f32 0.0, %v1867
    %v1884 = vsub.f32 0.0, %v1868
    %v1885 = vsub.f32 0.0, %v1869
    %v1886 = vsub.f32 0.0, %v1870
    %v1887 = vsub.f32 0.0, %v1871
    %v1888 = vsub.f32 0.0, %v1872
    %v1889 = vsub.f32 0.0, %v1873
    %v1890 = vsub.f32 0.0, %v1874
    %v1891 = vsub.f32 0.0, %v1875
    %v1892 = vmul.f32 %v1876, 1.442695
    %v1893 = vpow.pop %v1892
    %v1894 = vmul.f32 %v1877, 1.442695
    %v1895 = vpow.pop %v1894
    %v1896 = vmul.f32 %v1878, 1.442695
    %v1897 = vpow.pop %v1896
    %v1898 = vmul.f32 %v1879, 1.442695
    %v1899 = vpow.pop %v1898
    %v1900 = vmul.f32 %v1880, 1.442695
    %v1901 = vpow.pop %v1900
    %v1902 = vmul.f32 %v1881, 1.442695
    %v1903 = vpow.pop %v1902
    %v1904 = vmul.f32 %v1882, 1.442695
    %v1905 = vpow.pop %v1904
    %v1906 = vmul.f32 %v1883, 1.442695
    %v1907 = vpow.pop %v1906
    %v1908 = vmul.f32 %v1884, 1.442695
    %v1909 = vpow.pop %v1908
    %v1910 = vmul.f32 %v1885, 1.442695
    %v1911 = vpow.pop %v1910
    %v1912 = vmul.f32 %v1886, 1.442695
    %v1913 = vpow.pop %v1912
    %v1914 = vmul.f32 %v1887, 1.442695
    %v1915 = vpow.pop %v1914
    %v1916 = vmul.f32 %v1888, 1.442695
    %v1917 = vpow.pop %v1916
    %v1918 = vmul.f32 %v1889, 1.442695
    %v1919 = vpow.pop %v1918
    %v1920 = vmul.f32 %v1890, 1.442695
    %v1921 = vpow.pop %v1920
    %v1922 = vmul.f32 %v1891, 1.442695
    %v1923 = vpow.pop %v1922
    %v1924 = vadd.f32 %v1893, 1.0
    %v1925 = vlog2.pop %v1924
    %v1926 = vmul.f32 %v1925, 0.6931472
    %v1927 = vmul.f32 -0.5, %v1893
    %v1928 = vadd.f32 %v1927, 1.0
    %v1929 = vmul.f32 %v1928, %v1893
    %v1930 = vand.u32 2147483647, %v1893
    %vm1931 = vcmp.lt.f32.partialorder %v1930, 0.0004427343
    %v1932 = vsel %vm1931, %v1929, %v1926
    %v1933 = vadd.f32 %v1895, 1.0
    %v1934 = vlog2.pop %v1933
    %v1935 = vmul.f32 %v1934, 0.6931472
    %v1936 = vmul.f32 -0.5, %v1895
    %v1937 = vadd.f32 %v1936, 1.0
    %v1938 = vmul.f32 %v1937, %v1895
    %v1939 = vand.u32 2147483647, %v1895
    %vm1940 = vcmp.lt.f32.partialorder %v1939, 0.0004427343
    %v1941 = vsel %vm1940, %v1938, %v1935
    %v1942 = vadd.f32 %v1897, 1.0
    %v1943 = vlog2.pop %v1942
    %v1944 = vmul.f32 %v1943, 0.6931472
    %v1945 = vmul.f32 -0.5, %v1897
    %v1946 = vadd.f32 %v1945, 1.0
    %v1947 = vmul.f32 %v1946, %v1897
    %v1948 = vand.u32 2147483647, %v1897
    %vm1949 = vcmp.lt.f32.partialorder %v1948, 0.0004427343
    %v1950 = vsel %vm1949, %v1947, %v1944
    %v1951 = vadd.f32 %v1899, 1.0
    %v1952 = vlog2.pop %v1951
    %v1953 = vmul.f32 %v1952, 0.6931472
    %v1954 = vmul.f32 -0.5, %v1899
    %v1955 = vadd.f32 %v1954, 1.0
    %v1956 = vmul.f32 %v1955, %v1899
    %v1957 = vand.u32 2147483647, %v1899
    %vm1958 = vcmp.lt.f32.partialorder %v1957, 0.0004427343
    %v1959 = vsel %vm1958, %v1956, %v1953
    %v1960 = vadd.f32 %v1901, 1.0
    %v1961 = vlog2.pop %v1960
    %v1962 = vmul.f32 %v1961, 0.6931472
    %v1963 = vmul.f32 -0.5, %v1901
    %v1964 = vadd.f32 %v1963, 1.0
    %v1965 = vmul.f32 %v1964, %v1901
    %v1966 = vand.u32 2147483647, %v1901
    %vm1967 = vcmp.lt.f32.partialorder %v1966, 0.0004427343
    %v1968 = vsel %vm1967, %v1965, %v1962
    %v1969 = vadd.f32 %v1903, 1.0
    %v1970 = vlog2.pop %v1969
    %v1971 = vmul.f32 %v1970, 0.6931472
    %v1972 = vmul.f32 -0.5, %v1903
    %v1973 = vadd.f32 %v1972, 1.0
    %v1974 = vmul.f32 %v1973, %v1903
    %v1975 = vand.u32 2147483647, %v1903
    %vm1976 = vcmp.lt.f32.partialorder %v1975, 0.0004427343
    %v1977 = vsel %vm1976, %v1974, %v1971
    %v1978 = vadd.f32 %v1905, 1.0
    %v1979 = vlog2.pop %v1978
    %v1980 = vmul.f32 %v1979, 0.6931472
    %v1981 = vmul.f32 -0.5, %v1905
    %v1982 = vadd.f32 %v1981, 1.0
    %v1983 = vmul.f32 %v1982, %v1905
    %v1984 = vand.u32 2147483647, %v1905
    %vm1985 = vcmp.lt.f32.partialorder %v1984, 0.0004427343
    %v1986 = vsel %vm1985, %v1983, %v1980
    %v1987 = vadd.f32 %v1907, 1.0
    %v1988 = vlog2.pop %v1987
    %v1989 = vmul.f32 %v1988, 0.6931472
    %v1990 = vmul.f32 -0.5, %v1907
    %v1991 = vadd.f32 %v1990, 1.0
    %v1992 = vmul.f32 %v1991, %v1907
    %v1993 = vand.u32 2147483647, %v1907
    %vm1994 = vcmp.lt.f32.partialorder %v1993, 0.0004427343
    %v1995 = vsel %vm1994, %v1992, %v1989
    %v1996 = vadd.f32 %v1909, 1.0
    %v1997 = vlog2.pop %v1996
    %v1998 = vmul.f32 %v1997, 0.6931472
    %v1999 = vmul.f32 -0.5, %v1909
    %v2000 = vadd.f32 %v1999, 1.0
    %v2001 = vmul.f32 %v2000, %v1909
    %v2002 = vand.u32 2147483647, %v1909
    %vm2003 = vcmp.lt.f32.partialorder %v2002, 0.0004427343
    %v2004 = vsel %vm2003, %v2001, %v1998
    %v2005 = vadd.f32 %v1911, 1.0
    %v2006 = vlog2.pop %v2005
    %v2007 = vmul.f32 %v2006, 0.6931472
    %v2008 = vmul.f32 -0.5, %v1911
    %v2009 = vadd.f32 %v2008, 1.0
    %v2010 = vmul.f32 %v2009, %v1911
    %v2011 = vand.u32 2147483647, %v1911
    %vm2012 = vcmp.lt.f32.partialorder %v2011, 0.0004427343
    %v2013 = vsel %vm2012, %v2010, %v2007
    %v2014 = vadd.f32 %v1913, 1.0
    %v2015 = vlog2.pop %v2014
    %v2016 = vmul.f32 %v2015, 0.6931472
    %v2017 = vmul.f32 -0.5, %v1913
    %v2018 = vadd.f32 %v2017, 1.0
    %v2019 = vmul.f32 %v2018, %v1913
    %v2020 = vand.u32 2147483647, %v1913
    %vm2021 = vcmp.lt.f32.partialorder %v2020, 0.0004427343
    %v2022 = vsel %vm2021, %v2019, %v2016
    %v2023 = vadd.f32 %v1915, 1.0
    %v2024 = vlog2.pop %v2023
    %v2025 = vmul.f32 %v2024, 0.6931472
    %v2026 = vmul.f32 -0.5, %v1915
    %v2027 = vadd.f32 %v2026, 1.0
    %v2028 = vmul.f32 %v2027, %v1915
    %v2029 = vand.u32 2147483647, %v1915
    %vm2030 = vcmp.lt.f32.partialorder %v2029, 0.0004427343
    %v2031 = vsel %vm2030, %v2028, %v2025
    %v2032 = vadd.f32 %v1917, 1.0
    %v2033 = vlog2.pop %v2032
    %v2034 = vmul.f32 %v2033, 0.6931472
    %v2035 = vmul.f32 -0.5, %v1917
    %v2036 = vadd.f32 %v2035, 1.0
    %v2037 = vmul.f32 %v2036, %v1917
    %v2038 = vand.u32 2147483647, %v1917
    %vm2039 = vcmp.lt.f32.partialorder %v2038, 0.0004427343
    %v2040 = vsel %vm2039, %v2037, %v2034
    %v2041 = vadd.f32 %v1919, 1.0
    %v2042 = vlog2.pop %v2041
    %v2043 = vmul.f32 %v2042, 0.6931472
    %v2044 = vmul.f32 -0.5, %v1919
    %v2045 = vadd.f32 %v2044, 1.0
    %v2046 = vmul.f32 %v2045, %v1919
    %v2047 = vand.u32 2147483647, %v1919
    %vm2048 = vcmp.lt.f32.partialorder %v2047, 0.0004427343
    %v2049 = vsel %vm2048, %v2046, %v2043
    %v2050 = vadd.f32 %v1921, 1.0
    %v2051 = vlog2.pop %v2050
    %v2052 = vmul.f32 %v2051, 0.6931472
    %v2053 = vmul.f32 -0.5, %v1921
    %v2054 = vadd.f32 %v2053, 1.0
    %v2055 = vmul.f32 %v2054, %v1921
    %v2056 = vand.u32 2147483647, %v1921
    %vm2057 = vcmp.lt.f32.partialorder %v2056, 0.0004427343
    %v2058 = vsel %vm2057, %v2055, %v2052
    %v2059 = vadd.f32 %v1923, 1.0
    %v2060 = vlog2.pop %v2059
    %v2061 = vmul.f32 %v2060, 0.6931472
    %v2062 = vmul.f32 -0.5, %v1923
    %v2063 = vadd.f32 %v2062, 1.0
    %v2064 = vmul.f32 %v2063, %v1923
    %v2065 = vand.u32 2147483647, %v1923
    %vm2066 = vcmp.lt.f32.partialorder %v2065, 0.0004427343
    %v2067 = vsel %vm2066, %v2064, %v2061
    %v2068 = vadd.f32 %v1844, %v1932
    %v2069 = vadd.f32 %v1845, %v1941
    %v2070 = vadd.f32 %v1846, %v1950
    %v2071 = vadd.f32 %v1847, %v1959
    %v2072 = vadd.f32 %v1848, %v1968
    %v2073 = vadd.f32 %v1849, %v1977
    %v2074 = vadd.f32 %v1850, %v1986
    %v2075 = vadd.f32 %v1851, %v1995
    %v2076 = vadd.f32 %v1852, %v2004
    %v2077 = vadd.f32 %v1853, %v2013
    %v2078 = vadd.f32 %v1854, %v2022
    %v2079 = vadd.f32 %v1855, %v2031
    %v2080 = vadd.f32 %v1856, %v2040
    %v2081 = vadd.f32 %v1857, %v2049
    %v2082 = vadd.f32 %v1858, %v2058
    %v2083 = vadd.f32 %v1859, %v2067
    %v2100 = vcombine.low %v1691, %v1693
    %v2101 = vcombine.high %v1691, %v1693
    %v2102 = vcombine.low %v1734, %v1736
    %v2103 = vcombine.high %v1734, %v1736
    %v2105 = vunpack.c.l.s4 1983009808
    %v2106 = vunpack.c.0.s8 %v2105
    %v2107 = vlaneseq
    %v2108 = vshrl.u32 %v2107, 7
    %v2109 = vsub.s32 %v2106, %v2108
    %v2110 = vrot.slane %v2100, %v2109
    %v2112 = vunpack.c.l.s4 1983009808
    %v2113 = vunpack.c.0.s8 %v2112
    %v2114 = vlaneseq
    %v2115 = vshrl.u32 %v2114, 7
    %v2116 = vsub.s32 %v2113, %v2115
    %v2117 = vrot.slane %v2101, %v2116
    %v2119 = vunpack.c.l.s4 1983009808
    %v2120 = vunpack.c.0.s8 %v2119
    %v2121 = vlaneseq
    %v2122 = vshrl.u32 %v2121, 7
    %v2123 = vsub.s32 %v2120, %v2122
    %v2124 = vrot.slane %v2102, %v2123
    %v2126 = vunpack.c.l.s4 1983009808
    %v2127 = vunpack.c.0.s8 %v2126
    %v2128 = vlaneseq
    %v2129 = vshrl.u32 %v2128, 7
    %v2130 = vsub.s32 %v2127, %v2129
    %v2131 = vrot.slane %v2103, %v2130
    %v2132 = vcombine.low %v2110, %v2124
    %v2133 = vcombine.high %v2110, %v2124
    %v2134 = vcombine.low %v2117, %v2131
    %v2135 = vcombine.high %v2117, %v2131
    %v2136 = vcombine.low %v1777, %v1779
    %v2137 = vcombine.high %v1777, %v1779
    %v2138 = vcombine.low %v1820, %v1822
    %v2139 = vcombine.high %v1820, %v1822
    %v2141 = vunpack.c.l.s4 1983009808
    %v2142 = vunpack.c.0.s8 %v2141
    %v2143 = vlaneseq
    %v2144 = vshrl.u32 %v2143, 7
    %v2145 = vsub.s32 %v2142, %v2144
    %v2146 = vrot.slane %v2136, %v2145
    %v2148 = vunpack.c.l.s4 1983009808
    %v2149 = vunpack.c.0.s8 %v2148
    %v2150 = vlaneseq
    %v2151 = vshrl.u32 %v2150, 7
    %v2152 = vsub.s32 %v2149, %v2151
    %v2153 = vrot.slane %v2137, %v2152
    %v2155 = vunpack.c.l.s4 1983009808
    %v2156 = vunpack.c.0.s8 %v2155
    %v2157 = vlaneseq
    %v2158 = vshrl.u32 %v2157, 7
    %v2159 = vsub.s32 %v2156, %v2158
    %v2160 = vrot.slane %v2138, %v2159
    %v2162 = vunpack.c.l.s4 1983009808
    %v2163 = vunpack.c.0.s8 %v2162
    %v2164 = vlaneseq
    %v2165 = vshrl.u32 %v2164, 7
    %v2166 = vsub.s32 %v2163, %v2165
    %v2167 = vrot.slane %v2139, %v2166
    %v2168 = vcombine.low %v2146, %v2160
    %v2169 = vcombine.high %v2146, %v2160
    %v2170 = vcombine.low %v2153, %v2167
    %v2171 = vcombine.high %v2153, %v2167
    %v2172 = vcombine.low %v1695, %v1697
    %v2173 = vcombine.high %v1695, %v1697
    %v2174 = vcombine.low %v1738, %v1740
    %v2175 = vcombine.high %v1738, %v1740
    %v2177 = vunpack.c.l.s4 1983009808
    %v2178 = vunpack.c.0.s8 %v2177
    %v2179 = vlaneseq
    %v2180 = vshrl.u32 %v2179, 7
    %v2181 = vsub.s32 %v2178, %v2180
    %v2182 = vrot.slane %v2172, %v2181
    %v2184 = vunpack.c.l.s4 1983009808
    %v2185 = vunpack.c.0.s8 %v2184
    %v2186 = vlaneseq
    %v2187 = vshrl.u32 %v2186, 7
    %v2188 = vsub.s32 %v2185, %v2187
    %v2189 = vrot.slane %v2173, %v2188
    %v2191 = vunpack.c.l.s4 1983009808
    %v2192 = vunpack.c.0.s8 %v2191
    %v2193 = vlaneseq
    %v2194 = vshrl.u32 %v2193, 7
    %v2195 = vsub.s32 %v2192, %v2194
    %v2196 = vrot.slane %v2174, %v2195
    %v2198 = vunpack.c.l.s4 1983009808
    %v2199 = vunpack.c.0.s8 %v2198
    %v2200 = vlaneseq
    %v2201 = vshrl.u32 %v2200, 7
    %v2202 = vsub.s32 %v2199, %v2201
    %v2203 = vrot.slane %v2175, %v2202
    %v2204 = vcombine.low %v2182, %v2196
    %v2205 = vcombine.high %v2182, %v2196
    %v2206 = vcombine.low %v2189, %v2203
    %v2207 = vcombine.high %v2189, %v2203
    %v2208 = vcombine.low %v1781, %v1783
    %v2209 = vcombine.high %v1781, %v1783
    %v2210 = vcombine.low %v1824, %v1826
    %v2211 = vcombine.high %v1824, %v1826
    %v2213 = vunpack.c.l.s4 1983009808
    %v2214 = vunpack.c.0.s8 %v2213
    %v2215 = vlaneseq
    %v2216 = vshrl.u32 %v2215, 7
    %v2217 = vsub.s32 %v2214, %v2216
    %v2218 = vrot.slane %v2208, %v2217
    %v2220 = vunpack.c.l.s4 1983009808
    %v2221 = vunpack.c.0.s8 %v2220
    %v2222 = vlaneseq
    %v2223 = vshrl.u32 %v2222, 7
    %v2224 = vsub.s32 %v2221, %v2223
    %v2225 = vrot.slane %v2209, %v2224
    %v2227 = vunpack.c.l.s4 1983009808
    %v2228 = vunpack.c.0.s8 %v2227
    %v2229 = vlaneseq
    %v2230 = vshrl.u32 %v2229, 7
    %v2231 = vsub.s32 %v2228, %v2230
    %v2232 = vrot.slane %v2210, %v2231
    %v2234 = vunpack.c.l.s4 1983009808
    %v2235 = vunpack.c.0.s8 %v2234
    %v2236 = vlaneseq
    %v2237 = vshrl.u32 %v2236, 7
    %v2238 = vsub.s32 %v2235, %v2237
    %v2239 = vrot.slane %v2211, %v2238
    %v2240 = vcombine.low %v2218, %v2232
    %v2241 = vcombine.high %v2218, %v2232
    %v2242 = vcombine.low %v2225, %v2239
    %v2243 = vcombine.high %v2225, %v2239
    %v2260 = vmul.f32 %v1828, %v2132
    %v2261 = vmul.f32 %v1829, %v2168
    %v2262 = vmul.f32 %v1830, %v2133
    %v2263 = vmul.f32 %v1831, %v2169
    %v2264 = vmul.f32 %v1832, %v2134
    %v2265 = vmul.f32 %v1833, %v2170
    %v2266 = vmul.f32 %v1834, %v2135
    %v2267 = vmul.f32 %v1835, %v2171
    %v2268 = vmul.f32 %v1836, %v2204
    %v2269 = vmul.f32 %v1837, %v2240
    %v2270 = vmul.f32 %v1838, %v2205
    %v2271 = vmul.f32 %v1839, %v2241
    %v2272 = vmul.f32 %v1840, %v2206
    %v2273 = vmul.f32 %v1841, %v2242
    %v2274 = vmul.f32 %v1842, %v2207
    %v2275 = vmul.f32 %v1843, %v2243
    %v2292 = vcombine.low %v2068, %v2069
    %v2293 = vcombine.high %v2068, %v2069
    %v2294 = vcombine.low %v2070, %v2071
    %v2295 = vcombine.high %v2070, %v2071
    %v2297 = vunpack.c.l.s4 1983009808
    %v2298 = vunpack.c.0.s8 %v2297
    %v2299 = vlaneseq
    %v2300 = vshrl.u32 %v2299, 7
    %v2301 = vsub.s32 %v2298, %v2300
    %v2302 = vrot.slane %v2292, %v2301
    %v2304 = vunpack.c.l.s4 1983009808
    %v2305 = vunpack.c.0.s8 %v2304
    %v2306 = vlaneseq
    %v2307 = vshrl.u32 %v2306, 7
    %v2308 = vsub.s32 %v2305, %v2307
    %v2309 = vrot.slane %v2293, %v2308
    %v2311 = vunpack.c.l.s4 1983009808
    %v2312 = vunpack.c.0.s8 %v2311
    %v2313 = vlaneseq
    %v2314 = vshrl.u32 %v2313, 7
    %v2315 = vsub.s32 %v2312, %v2314
    %v2316 = vrot.slane %v2294, %v2315
    %v2318 = vunpack.c.l.s4 1983009808
    %v2319 = vunpack.c.0.s8 %v2318
    %v2320 = vlaneseq
    %v2321 = vshrl.u32 %v2320, 7
    %v2322 = vsub.s32 %v2319, %v2321
    %v2323 = vrot.slane %v2295, %v2322
    %v2324 = vcombine.low %v2302, %v2316
    %v2325 = vcombine.high %v2302, %v2316
    %v2326 = vcombine.low %v2309, %v2323
    %v2327 = vcombine.high %v2309, %v2323
    %v2328 = vcombine.low %v2072, %v2073
    %v2329 = vcombine.high %v2072, %v2073
    %v2330 = vcombine.low %v2074, %v2075
    %v2331 = vcombine.high %v2074, %v2075
    %v2333 = vunpack.c.l.s4 1983009808
    %v2334 = vunpack.c.0.s8 %v2333
    %v2335 = vlaneseq
    %v2336 = vshrl.u32 %v2335, 7
    %v2337 = vsub.s32 %v2334, %v2336
    %v2338 = vrot.slane %v2328, %v2337
    %v2340 = vunpack.c.l.s4 1983009808
    %v2341 = vunpack.c.0.s8 %v2340
    %v2342 = vlaneseq
    %v2343 = vshrl.u32 %v2342, 7
    %v2344 = vsub.s32 %v2341, %v2343
    %v2345 = vrot.slane %v2329, %v2344
    %v2347 = vunpack.c.l.s4 1983009808
    %v2348 = vunpack.c.0.s8 %v2347
    %v2349 = vlaneseq
    %v2350 = vshrl.u32 %v2349, 7
    %v2351 = vsub.s32 %v2348, %v2350
    %v2352 = vrot.slane %v2330, %v2351
    %v2354 = vunpack.c.l.s4 1983009808
    %v2355 = vunpack.c.0.s8 %v2354
    %v2356 = vlaneseq
    %v2357 = vshrl.u32 %v2356, 7
    %v2358 = vsub.s32 %v2355, %v2357
    %v2359 = vrot.slane %v2331, %v2358
    %v2360 = vcombine.low %v2338, %v2352
    %v2361 = vcombine.high %v2338, %v2352
    %v2362 = vcombine.low %v2345, %v2359
    %v2363 = vcombine.high %v2345, %v2359
    %v2364 = vcombine.low %v2076, %v2077
    %v2365 = vcombine.high %v2076, %v2077
    %v2366 = vcombine.low %v2078, %v2079
    %v2367 = vcombine.high %v2078, %v2079
    %v2369 = vunpack.c.l.s4 1983009808
    %v2370 = vunpack.c.0.s8 %v2369
    %v2371 = vlaneseq
    %v2372 = vshrl.u32 %v2371, 7
    %v2373 = vsub.s32 %v2370, %v2372
    %v2374 = vrot.slane %v2364, %v2373
    %v2376 = vunpack.c.l.s4 1983009808
    %v2377 = vunpack.c.0.s8 %v2376
    %v2378 = vlaneseq
    %v2379 = vshrl.u32 %v2378, 7
    %v2380 = vsub.s32 %v2377, %v2379
    %v2381 = vrot.slane %v2365, %v2380
    %v2383 = vunpack.c.l.s4 1983009808
    %v2384 = vunpack.c.0.s8 %v2383
    %v2385 = vlaneseq
    %v2386 = vshrl.u32 %v2385, 7
    %v2387 = vsub.s32 %v2384, %v2386
    %v2388 = vrot.slane %v2366, %v2387
    %v2390 = vunpack.c.l.s4 1983009808
    %v2391 = vunpack.c.0.s8 %v2390
    %v2392 = vlaneseq
    %v2393 = vshrl.u32 %v2392, 7
    %v2394 = vsub.s32 %v2391, %v2393
    %v2395 = vrot.slane %v2367, %v2394
    %v2396 = vcombine.low %v2374, %v2388
    %v2397 = vcombine.high %v2374, %v2388
    %v2398 = vcombine.low %v2381, %v2395
    %v2399 = vcombine.high %v2381, %v2395
    %v2400 = vcombine.low %v2080, %v2081
    %v2401 = vcombine.high %v2080, %v2081
    %v2402 = vcombine.low %v2082, %v2083
    %v2403 = vcombine.high %v2082, %v2083
    %v2405 = vunpack.c.l.s4 1983009808
    %v2406 = vunpack.c.0.s8 %v2405
    %v2407 = vlaneseq
    %v2408 = vshrl.u32 %v2407, 7
    %v2409 = vsub.s32 %v2406, %v2408
    %v2410 = vrot.slane %v2400, %v2409
    %v2412 = vunpack.c.l.s4 1983009808
    %v2413 = vunpack.c.0.s8 %v2412
    %v2414 = vlaneseq
    %v2415 = vshrl.u32 %v2414, 7
    %v2416 = vsub.s32 %v2413, %v2415
    %v2417 = vrot.slane %v2401, %v2416
    %v2419 = vunpack.c.l.s4 1983009808
    %v2420 = vunpack.c.0.s8 %v2419
    %v2421 = vlaneseq
    %v2422 = vshrl.u32 %v2421, 7
    %v2423 = vsub.s32 %v2420, %v2422
    %v2424 = vrot.slane %v2402, %v2423
    %v2426 = vunpack.c.l.s4 1983009808
    %v2427 = vunpack.c.0.s8 %v2426
    %v2428 = vlaneseq
    %v2429 = vshrl.u32 %v2428, 7
    %v2430 = vsub.s32 %v2427, %v2429
    %v2431 = vrot.slane %v2403, %v2430
    %v2432 = vcombine.low %v2410, %v2424
    %v2433 = vcombine.high %v2410, %v2424
    %v2434 = vcombine.low %v2417, %v2431
    %v2435 = vcombine.high %v2417, %v2431
    %v2452 = vsub.f32 %v2260, %v2324
    %v2453 = vsub.f32 %v2261, %v2360
    %v2454 = vsub.f32 %v2262, %v2325
    %v2455 = vsub.f32 %v2263, %v2361
    %v2456 = vsub.f32 %v2264, %v2326
    %v2457 = vsub.f32 %v2265, %v2362
    %v2458 = vsub.f32 %v2266, %v2327
    %v2459 = vsub.f32 %v2267, %v2363
    %v2460 = vsub.f32 %v2268, %v2396
    %v2461 = vsub.f32 %v2269, %v2432
    %v2462 = vsub.f32 %v2270, %v2397
    %v2463 = vsub.f32 %v2271, %v2433
    %v2464 = vsub.f32 %v2272, %v2398
    %v2465 = vsub.f32 %v2273, %v2434
    %v2466 = vsub.f32 %v2274, %v2399
    %v2467 = vsub.f32 %v2275, %v2435
    %v2484 = vcombine.low %v2452, %v2454
    %v2485 = vcombine.high %v2452, %v2454
    %v2486 = vcombine.low %v2456, %v2458
    %v2487 = vcombine.high %v2456, %v2458
    %v2489 = vunpack.c.l.s4 1983009808
    %v2490 = vunpack.c.0.s8 %v2489
    %v2491 = vlaneseq
    %v2492 = vshrl.u32 %v2491, 7
    %v2493 = vsub.s32 %v2490, %v2492
    %v2494 = vrot.slane %v2484, %v2493
    %v2496 = vunpack.c.l.s4 1983009808
    %v2497 = vunpack.c.0.s8 %v2496
    %v2498 = vlaneseq
    %v2499 = vshrl.u32 %v2498, 7
    %v2500 = vsub.s32 %v2497, %v2499
    %v2501 = vrot.slane %v2485, %v2500
    %v2503 = vunpack.c.l.s4 1983009808
    %v2504 = vunpack.c.0.s8 %v2503
    %v2505 = vlaneseq
    %v2506 = vshrl.u32 %v2505, 7
    %v2507 = vsub.s32 %v2504, %v2506
    %v2508 = vrot.slane %v2486, %v2507
    %v2510 = vunpack.c.l.s4 1983009808
    %v2511 = vunpack.c.0.s8 %v2510
    %v2512 = vlaneseq
    %v2513 = vshrl.u32 %v2512, 7
    %v2514 = vsub.s32 %v2511, %v2513
    %v2515 = vrot.slane %v2487, %v2514
    %v2516 = vcombine.low %v2494, %v2508
    %v2517 = vcombine.high %v2494, %v2508
    %v2518 = vcombine.low %v2501, %v2515
    %v2519 = vcombine.high %v2501, %v2515
    %v2520 = vcombine.low %v2453, %v2455
    %v2521 = vcombine.high %v2453, %v2455
    %v2522 = vcombine.low %v2457, %v2459
    %v2523 = vcombine.high %v2457, %v2459
    %v2525 = vunpack.c.l.s4 1983009808
    %v2526 = vunpack.c.0.s8 %v2525
    %v2527 = vlaneseq
    %v2528 = vshrl.u32 %v2527, 7
    %v2529 = vsub.s32 %v2526, %v2528
    %v2530 = vrot.slane %v2520, %v2529
    %v2532 = vunpack.c.l.s4 1983009808
    %v2533 = vunpack.c.0.s8 %v2532
    %v2534 = vlaneseq
    %v2535 = vshrl.u32 %v2534, 7
    %v2536 = vsub.s32 %v2533, %v2535
    %v2537 = vrot.slane %v2521, %v2536
    %v2539 = vunpack.c.l.s4 1983009808
    %v2540 = vunpack.c.0.s8 %v2539
    %v2541 = vlaneseq
    %v2542 = vshrl.u32 %v2541, 7
    %v2543 = vsub.s32 %v2540, %v2542
    %v2544 = vrot.slane %v2522, %v2543
    %v2546 = vunpack.c.l.s4 1983009808
    %v2547 = vunpack.c.0.s8 %v2546
    %v2548 = vlaneseq
    %v2549 = vshrl.u32 %v2548, 7
    %v2550 = vsub.s32 %v2547, %v2549
    %v2551 = vrot.slane %v2523, %v2550
    %v2552 = vcombine.low %v2530, %v2544
    %v2553 = vcombine.high %v2530, %v2544
    %v2554 = vcombine.low %v2537, %v2551
    %v2555 = vcombine.high %v2537, %v2551
    %v2556 = vcombine.low %v2460, %v2462
    %v2557 = vcombine.high %v2460, %v2462
    %v2558 = vcombine.low %v2464, %v2466
    %v2559 = vcombine.high %v2464, %v2466
    %v2561 = vunpack.c.l.s4 1983009808
    %v2562 = vunpack.c.0.s8 %v2561
    %v2563 = vlaneseq
    %v2564 = vshrl.u32 %v2563, 7
    %v2565 = vsub.s32 %v2562, %v2564
    %v2566 = vrot.slane %v2556, %v2565
    %v2568 = vunpack.c.l.s4 1983009808
    %v2569 = vunpack.c.0.s8 %v2568
    %v2570 = vlaneseq
    %v2571 = vshrl.u32 %v2570, 7
    %v2572 = vsub.s32 %v2569, %v2571
    %v2573 = vrot.slane %v2557, %v2572
    %v2575 = vunpack.c.l.s4 1983009808
    %v2576 = vunpack.c.0.s8 %v2575
    %v2577 = vlaneseq
    %v2578 = vshrl.u32 %v2577, 7
    %v2579 = vsub.s32 %v2576, %v2578
    %v2580 = vrot.slane %v2558, %v2579
    %v2582 = vunpack.c.l.s4 1983009808
    %v2583 = vunpack.c.0.s8 %v2582
    %v2584 = vlaneseq
    %v2585 = vshrl.u32 %v2584, 7
    %v2586 = vsub.s32 %v2583, %v2585
    %v2587 = vrot.slane %v2559, %v2586
    %v2588 = vcombine.low %v2566, %v2580
    %v2589 = vcombine.high %v2566, %v2580
    %v2590 = vcombine.low %v2573, %v2587
    %v2591 = vcombine.high %v2573, %v2587
    %v2592 = vcombine.low %v2461, %v2463
    %v2593 = vcombine.high %v2461, %v2463
    %v2594 = vcombine.low %v2465, %v2467
    %v2595 = vcombine.high %v2465, %v2467
    %v2597 = vunpack.c.l.s4 1983009808
    %v2598 = vunpack.c.0.s8 %v2597
    %v2599 = vlaneseq
    %v2600 = vshrl.u32 %v2599, 7
    %v2601 = vsub.s32 %v2598, %v2600
    %v2602 = vrot.slane %v2592, %v2601
    %v2604 = vunpack.c.l.s4 1983009808
    %v2605 = vunpack.c.0.s8 %v2604
    %v2606 = vlaneseq
    %v2607 = vshrl.u32 %v2606, 7
    %v2608 = vsub.s32 %v2605, %v2607
    %v2609 = vrot.slane %v2593, %v2608
    %v2611 = vunpack.c.l.s4 1983009808
    %v2612 = vunpack.c.0.s8 %v2611
    %v2613 = vlaneseq
    %v2614 = vshrl.u32 %v2613, 7
    %v2615 = vsub.s32 %v2612, %v2614
    %v2616 = vrot.slane %v2594, %v2615
    %v2618 = vunpack.c.l.s4 1983009808
    %v2619 = vunpack.c.0.s8 %v2618
    %v2620 = vlaneseq
    %v2621 = vshrl.u32 %v2620, 7
    %v2622 = vsub.s32 %v2619, %v2621
    %v2623 = vrot.slane %v2595, %v2622
    %v2624 = vcombine.low %v2602, %v2616
    %v2625 = vcombine.high %v2602, %v2616
    %v2626 = vcombine.low %v2609, %v2623
    %v2627 = vcombine.high %v2609, %v2623
    %v2644 = vadd.f32 %v2516, %v2517
    %v2645 = vadd.f32 %v2644, %v2518
    %v2646 = vadd.f32 %v2645, %v2519
    %v2647 = vadd.f32 %v2646, %v2552
    %v2648 = vadd.f32 %v2647, %v2553
    %v2649 = vadd.f32 %v2648, %v2554
    %v2650 = vadd.f32 %v2649, %v2555
    %2651 = vadd.xlane.f32.xlu0 %v2650
    %v2652 = vpop.xlane.xlu0 %2651
    %v2653 = vadd.f32 %v2588, %v2589
    %v2654 = vadd.f32 %v2653, %v2590
    %v2655 = vadd.f32 %v2654, %v2591
    %v2656 = vadd.f32 %v2655, %v2624
    %v2657 = vadd.f32 %v2656, %v2625
    %v2658 = vadd.f32 %v2657, %v2626
    %v2659 = vadd.f32 %v2658, %v2627
    %2660 = vadd.xlane.f32.xlu0 %v2659
    %v2661 = vpop.xlane.xlu0 %2660
    %v2662 = vmul.f32 %v1164, -0.5
    %v2663 = vmul.f32 %v1165, -0.5
    %v2664 = vmul.f32 %v2662, %v1164
    %v2665 = vmul.f32 %v2663, %v1165
    %v2666 = vsub.f32 %v2664, 0.9189385
    %v2667 = vsub.f32 %v2665, 0.9189385
    %v2668 = vsel %vm1182, %v2666, 0.0
    %2669 = vadd.xlane.f32.xlu0 %v2668
    %v2670 = vpop.xlane.xlu0 %2669
    %v2671 = vsel %vm1182, %v2667, 0.0
    %2672 = vadd.xlane.f32.xlu0 %v2671
    %v2673 = vpop.xlane.xlu0 %2672
    %v2674 = vmul.f32 %v190, -0.5
    %v2675 = vmul.f32 %v191, -0.5
    %v2676 = vmul.f32 %v2674, %v190
    %v2677 = vmul.f32 %v2675, %v191
    %2680 = vrot.lane.b32.xlu0 %v1136, 112
    %v2681 = vpop.permute.xlu0 %2680
    %2682 = vrot.lane.b32.xlu0 %v1139, 112
    %v2683 = vpop.permute.xlu0 %2682
    %v2686 = vsub.f32 %v2676, %v2681
    %v2687 = vsub.f32 %v2677, %v2683
    %v2688 = vsub.f32 %v2686, 0.9189385
    %v2689 = vsub.f32 %v2687, 0.9189385
    %v2690 = vsel %vm1182, %v2688, 0.0
    %2691 = vadd.xlane.f32.xlu0 %v2690
    %v2692 = vpop.xlane.xlu0 %2691
    %v2693 = vsel %vm1182, %v2689, 0.0
    %2694 = vadd.xlane.f32.xlu0 %v2693
    %v2695 = vpop.xlane.xlu0 %2694
    %v2696 = vsub.f32 %v2692, %v2670
    %v2697 = vsub.f32 %v2695, %v2673
    %v2698 = vsub.f32 %v2652, %v2696
    %v2699 = vsub.f32 %v2661, %v2697
    %v2700 = vpack.c.bf16 %v1695, %v1691
    %v2701 = vpack.c.bf16 %v1697, %v1693
    %v2702 = vpack.c.bf16 %v1738, %v1734
    %v2703 = vpack.c.bf16 %v1740, %v1736
    %v2704 = vpack.c.bf16 %v1781, %v1777
    %v2705 = vpack.c.bf16 %v1783, %v1779
    %v2706 = vpack.c.bf16 %v1824, %v1820
    %v2707 = vpack.c.bf16 %v1826, %v1822
    %v2716 = vcombine.low %v2700, %v2701
    %v2717 = vcombine.high %v2700, %v2701
    %v2718 = vcombine.low %v2702, %v2703
    %v2719 = vcombine.high %v2702, %v2703
    %v2720 = vcombine.low %v2704, %v2705
    %v2721 = vcombine.high %v2704, %v2705
    %v2722 = vcombine.low %v2706, %v2707
    %v2723 = vcombine.high %v2706, %v2707
    %v2725 = vunpack.c.l.s4 1966171168
    %v2726 = vunpack.c.0.s8 %v2725
    %v2727 = vlaneseq
    %v2728 = vshrl.u32 %v2727, 7
    %v2729 = vsub.s32 %v2726, %v2728
    %v2730 = vrot.slane %v2716, %v2729
    %v2732 = vunpack.c.l.s4 1966171168
    %v2733 = vunpack.c.0.s8 %v2732
    %v2734 = vlaneseq
    %v2735 = vshrl.u32 %v2734, 7
    %v2736 = vsub.s32 %v2733, %v2735
    %v2737 = vrot.slane %v2717, %v2736
    %v2739 = vunpack.c.l.s4 1966171168
    %v2740 = vunpack.c.0.s8 %v2739
    %v2741 = vlaneseq
    %v2742 = vshrl.u32 %v2741, 7
    %v2743 = vsub.s32 %v2740, %v2742
    %v2744 = vrot.slane %v2718, %v2743
    %v2746 = vunpack.c.l.s4 1966171168
    %v2747 = vunpack.c.0.s8 %v2746
    %v2748 = vlaneseq
    %v2749 = vshrl.u32 %v2748, 7
    %v2750 = vsub.s32 %v2747, %v2749
    %v2751 = vrot.slane %v2719, %v2750
    %v2753 = vunpack.c.l.s4 1966171168
    %v2754 = vunpack.c.0.s8 %v2753
    %v2755 = vlaneseq
    %v2756 = vshrl.u32 %v2755, 7
    %v2757 = vsub.s32 %v2754, %v2756
    %v2758 = vrot.slane %v2720, %v2757
    %v2760 = vunpack.c.l.s4 1966171168
    %v2761 = vunpack.c.0.s8 %v2760
    %v2762 = vlaneseq
    %v2763 = vshrl.u32 %v2762, 7
    %v2764 = vsub.s32 %v2761, %v2763
    %v2765 = vrot.slane %v2721, %v2764
    %v2767 = vunpack.c.l.s4 1966171168
    %v2768 = vunpack.c.0.s8 %v2767
    %v2769 = vlaneseq
    %v2770 = vshrl.u32 %v2769, 7
    %v2771 = vsub.s32 %v2768, %v2770
    %v2772 = vrot.slane %v2722, %v2771
    %v2774 = vunpack.c.l.s4 1966171168
    %v2775 = vunpack.c.0.s8 %v2774
    %v2776 = vlaneseq
    %v2777 = vshrl.u32 %v2776, 7
    %v2778 = vsub.s32 %v2775, %v2777
    %v2779 = vrot.slane %v2723, %v2778
    %v2780 = vcombine.low %v2730, %v2744
    %v2781 = vcombine.high %v2730, %v2744
    %v2782 = vcombine.low %v2737, %v2751
    %v2783 = vcombine.high %v2737, %v2751
    %v2784 = vcombine.low %v2758, %v2772
    %v2785 = vcombine.high %v2758, %v2772
    %v2786 = vcombine.low %v2765, %v2779
    %v2787 = vcombine.high %v2765, %v2779
    %v2789 = vunpack.c.l.s4 1966171168
    %v2790 = vunpack.c.0.s8 %v2789
    %v2791 = vlaneseq
    %v2792 = vshrl.u32 %v2791, 7
    %v2793 = vsub.s32 %v2790, %v2792
    %v2794 = vrot.slane %v2780, %v2793
    %v2796 = vunpack.c.l.s4 1966171168
    %v2797 = vunpack.c.0.s8 %v2796
    %v2798 = vlaneseq
    %v2799 = vshrl.u32 %v2798, 7
    %v2800 = vsub.s32 %v2797, %v2799
    %v2801 = vrot.slane %v2782, %v2800
    %v2803 = vunpack.c.l.s4 1966171168
    %v2804 = vunpack.c.0.s8 %v2803
    %v2805 = vlaneseq
    %v2806 = vshrl.u32 %v2805, 7
    %v2807 = vsub.s32 %v2804, %v2806
    %v2808 = vrot.slane %v2781, %v2807
    %v2810 = vunpack.c.l.s4 1966171168
    %v2811 = vunpack.c.0.s8 %v2810
    %v2812 = vlaneseq
    %v2813 = vshrl.u32 %v2812, 7
    %v2814 = vsub.s32 %v2811, %v2813
    %v2815 = vrot.slane %v2783, %v2814
    %v2817 = vunpack.c.l.s4 1966171168
    %v2818 = vunpack.c.0.s8 %v2817
    %v2819 = vlaneseq
    %v2820 = vshrl.u32 %v2819, 7
    %v2821 = vsub.s32 %v2818, %v2820
    %v2822 = vrot.slane %v2784, %v2821
    %v2824 = vunpack.c.l.s4 1966171168
    %v2825 = vunpack.c.0.s8 %v2824
    %v2826 = vlaneseq
    %v2827 = vshrl.u32 %v2826, 7
    %v2828 = vsub.s32 %v2825, %v2827
    %v2829 = vrot.slane %v2786, %v2828
    %v2831 = vunpack.c.l.s4 1966171168
    %v2832 = vunpack.c.0.s8 %v2831
    %v2833 = vlaneseq
    %v2834 = vshrl.u32 %v2833, 7
    %v2835 = vsub.s32 %v2832, %v2834
    %v2836 = vrot.slane %v2785, %v2835
    %v2838 = vunpack.c.l.s4 1966171168
    %v2839 = vunpack.c.0.s8 %v2838
    %v2840 = vlaneseq
    %v2841 = vshrl.u32 %v2840, 7
    %v2842 = vsub.s32 %v2839, %v2841
    %v2843 = vrot.slane %v2787, %v2842
    %v2844 = vcombine.low %v2794, %v2822
    %v2845 = vcombine.high %v2794, %v2822
    %v2846 = vcombine.low %v2801, %v2829
    %v2847 = vcombine.high %v2801, %v2829
    %v2848 = vcombine.low %v2808, %v2836
    %v2849 = vcombine.high %v2808, %v2836
    %v2850 = vcombine.low %v2815, %v2843
    %v2851 = vcombine.high %v2815, %v2843
    %2860 = vst [vmem:[#allocation7] sm:$0xff] %v2844
    %2861 = vst [vmem:[#allocation7 + $0x8] sm:$0xff] %v2848
    %2862 = vst [vmem:[#allocation7 + $0x10] sm:$0xff] %v2845
    %2863 = vst [vmem:[#allocation7 + $0x18] sm:$0xff] %v2849
    %2864 = vst [vmem:[#allocation7 + $0x20] sm:$0xff] %v2846
    %2865 = vst [vmem:[#allocation7 + $0x28] sm:$0xff] %v2850
    %2866 = vst [vmem:[#allocation7 + $0x30] sm:$0xff] %v2847
    %2867 = vst [vmem:[#allocation7 + $0x38] sm:$0xff] %v2851
    %v2868 = vsel %vm1182, %v1164, %v2652
    %v2869 = vsel %vm1182, %v1165, %v2661
    %vm2870 = vcmask 138240
    %v2871 = vsel %vm2870, %v2868, %v2696
    %v2872 = vsel %vm2870, %v2869, %v2697
    %vm2873 = vcmask 146432
    %v2874 = vsel %vm2873, %v2871, %v2698
    %v2875 = vsel %vm2873, %v2872, %v2699
    %vm2876 = vcmask 154624
    %v2877 = vsel %vm2876, %v2874, 0.0
    %v2878 = vsel %vm2876, %v2875, 0.0
    %2879 = vst [vmem:[#allocation8] sm:$0xff] %v2877
    %2880 = vst [vmem:[#allocation8 + $0x8] sm:$0xff] %v2878
    // Predicated region
    $region50: #{tpu_custom_call.1} parent=1 // pred_check
      _
    $region51: #{tpu_custom_call.1} parent=1 // pred_check_branch
      %2882 = sbr.rel (0) target = $region53
    $region52: #{tpu_custom_call.1} parent=1 // pred_region
      %s2884 = ssub.s32 1024, 128
      %2885 = vsyncadd [#allocation4], %s2884
      %s2886 = sshll.u32 [#allocation7], 4
      %s2887 = int_to_ptr.vmem [resolvable:$true] %s2886
      %2892 = dma.vmem_to_hbm [thread:$0]  %s2887, 128, %s10, [#allocation4], 128, 128, 8
    $region53: #{tpu_custom_call.1} parent=1 // pred_fallthru
      _
    // Predicated region
    $region54: #{tpu_custom_call.1} parent=1 // pred_check
      _
    $region55: #{tpu_custom_call.1} parent=1 // pred_check_branch
      %2894 = sbr.rel (0) target = $region57
    $region56: #{tpu_custom_call.1} parent=1 // pred_region
      %s2896 = ssub.s32 256, 32
      %2897 = vsyncadd [#allocation9], %s2896
      %s2898 = sshll.u32 [#allocation8], 4
      %s2899 = int_to_ptr.vmem [resolvable:$true] %s2898
      %2904 = dma.vmem_to_hbm [thread:$0]  %s2899, 32, %s11, [#allocation9], 32, 32, 2
    $region57: #{tpu_custom_call.1} parent=1 // pred_fallthru
      _
    // Predicated region
    $region58: #{tpu_custom_call.1} parent=1 // pred_check
      _
    $region59: #{tpu_custom_call.1} parent=1 // pred_check_branch
      %2906 = sbr.rel (0) target = $region61
    $region60: #{tpu_custom_call.1} parent=1 // pred_region
      %2907 = dma.done [#allocation4], 1024
    $region61: #{tpu_custom_call.1} parent=1 // pred_fallthru
      _
    // Predicated region
    $region62: #{tpu_custom_call.1} parent=1 // pred_check
      _
    $region63: #{tpu_custom_call.1} parent=1 // pred_check_branch
      %2909 = sbr.rel (0) target = $region65
    $region64: #{tpu_custom_call.1} parent=1 // pred_region
      %2910 = dma.done [#allocation9], 256
    $region65: #{tpu_custom_call.1} parent=1 // pred_fallthru
      _
    %2911 = vsyncpa [#allocation3], 1
    %2912 = vsyncpa [#allocation6], 1
    %2913 = vsyncpa [#allocation4], 1
    %2914 = vsyncpa [#allocation9], 1

</llo_original>
